<compile_context>
chip_gen: v6e
topology: v6e:2x2x1
jax: 0.10.0
libtpu: 0.0.40
codegen_flags: <defaults>
</compile_context>

<pallas_src>
import functools
import math

import jax
import jax.numpy as jnp
from jax import lax
from jax.experimental import pallas as pl
from jax.experimental.pallas import tpu as pltpu  # noqa: F401  (TPU backend)

# --- hyperparameters (the "args" object of the PyTorch module) ---------------
NU = 64          # number of nodes (args.nu)
NE = 32          # number of input features (args.ne / number_of_features)
HIDDEN = 32      # args.hidden
LABELS = 8       # number_of_labels
ALPHA = 0.1      # args.alpha (teleport probability)
ITER_TIME = 10   # args.iter_time (power-iteration steps, 'approximate' model)
BATCH = 2        # independent feature sets processed in one pallas_call


# --- fused Pallas kernel ------------------------------------------------------
def appnp_kernel(x_ref, w1_ref, b1_ref, w2_ref, b2_ref, ahat_ref, o_ref,
                 *, batch, nu, labels, alpha, iter_time):
    # ---- MLP on the row-stacked batch: [B*NU, NE] @ [NE, H] -> [B*NU, H] ----
    h1 = jnp.dot(x_ref[...], w1_ref[...],
                 preferred_element_type=jnp.float32) + b1_ref[...]
    h1 = jnp.maximum(h1, 0.0)
    # dropout(p, training=False) is identity -> omitted
    h2 = jnp.dot(h1, w2_ref[...],
                 preferred_element_type=jnp.float32) + b2_ref[...]   # [B*NU, L]

    # ---- one-time transpose to lane-dense propagation layout [B*L, NU] ------
    # (static per-sample slices; B is small, unrolled at trace time)
    h2_t = jnp.concatenate(
        [h2[b * nu:(b + 1) * nu, :].T for b in range(batch)], axis=0)  # [B*L, NU]

    # Hoist loop invariants off the iter_time-deep serial chain.
    # (A_hat @ P)^T = P^T @ A_hat^T ; fold (1-alpha) into A_hat^T once.
    ahat_t_scaled = (1.0 - alpha) * ahat_ref[...].T                     # [NU, NU]
    alpha_h2_t = alpha * h2_t                                           # [B*L, NU]

    def body(_, p_t):
        # f32 MXU matmul; no per-iteration casts on the critical chain.
        return jnp.dot(p_t, ahat_t_scaled,
                       preferred_element_type=jnp.float32) + alpha_h2_t

    p_t = lax.fori_loop(0, iter_time, body, h2_t, unroll=True)          # [B*L, NU]

    # ---- log_softmax over the labels axis (sublane reduce), per sample ------
    for b in range(batch):
        pb = p_t[b * labels:(b + 1) * labels, :]                         # [L, NU]
        z = pb - jnp.max(pb, axis=0, keepdims=True)
        lse = jnp.log(jnp.sum(jnp.exp(z), axis=0, keepdims=True))
        o_ref[b] = (z - lse).astype(o_ref.dtype)                         # lane-dense store


def appnp_forward(x_batch, w1, b1, w2, b2, a_hat):
    """Batched fused APPNP forward pass.

    x_batch: [B, NU, NE]; weights / A_hat shared across the batch.
    Single kernel invocation (no grid); batch folded into the matmul rows.
    Returns [B, NU, LABELS] log-probabilities.
    """
    B, nu, ne = x_batch.shape
    x_flat = x_batch.reshape(B * nu, ne)          # fold batch into MXU rows

    flops = 2 * B * (nu * ne * HIDDEN
                     + nu * HIDDEN * LABELS
                     + ITER_TIME * LABELS * nu * nu)
    bytes_accessed = 4 * (B * nu * ne + ne * HIDDEN + HIDDEN
                          + HIDDEN * LABELS + LABELS
                          + nu * nu + B * LABELS * nu)
    cost = pl.CostEstimate(flops=flops,
                           transcendentals=B * nu * (LABELS + 1),
                           bytes_accessed=bytes_accessed)

    kernel = functools.partial(appnp_kernel, batch=B, nu=nu, labels=LABELS,
                               alpha=ALPHA, iter_time=ITER_TIME)

    # Whole arrays fit trivially in VMEM (<0.2 MiB) -> no tiling, no grid.
    out_t = pl.pallas_call(
        kernel,
        out_shape=jax.ShapeDtypeStruct((B, LABELS, nu), jnp.float32),
        cost_estimate=cost,
    )(x_flat, w1, b1, w2, b2, a_hat)

    # back to the module's [nodes, labels] per-sample layout
    return jnp.swapaxes(out_t, 1, 2)              # [B, NU, LABELS]


# --- glue: parameter init, sparse-feature densification, adjacency norm ------
def xavier_uniform(key, fan_in, fan_out):
    bound = math.sqrt(6.0 / (fan_in + fan_out))
    return jax.random.uniform(key, (fan_in, fan_out), jnp.float32, -bound, bound)


def bias_uniform(key, size):
    stdv = 1.0 / math.sqrt(size)
    return jax.random.uniform(key, (1, size), jnp.float32, -stdv, stdv)


def densify_features(feature_indices, feature_values, nu, ne):
    """torch.sparse.FloatTensor(indices, values, [nu, ne]) -> dense (dups sum)."""
    rows, cols = feature_indices[0], feature_indices[1]
    dense = jnp.zeros((nu, ne), jnp.float32)
    return dense.at[rows, cols].add(feature_values)


def normalize_adjacency(a):
    """A_hat = D^{-1/2} (A + I) D^{-1/2}."""
    a_tilde = a + jnp.eye(a.shape[0], dtype=a.dtype)
    deg = a_tilde.sum(axis=0)
    d_inv_sqrt = 1.0 / jnp.sqrt(deg)
    return a_tilde * d_inv_sqrt[:, None] * d_inv_sqrt[None, :]


def appnp_reference(x, w1, b1, w2, b2, a_hat):
    """Pure-JAX f32 reference for one sample (correctness oracle)."""
    hp = lax.Precision.HIGHEST
    h1 = jnp.maximum(jnp.dot(x, w1, precision=hp) + b1, 0.0)
    h2 = jnp.dot(h1, w2, precision=hp) + b2
    p = h2
    for _ in range(ITER_TIME):
        p = (1.0 - ALPHA) * jnp.dot(a_hat, p, precision=hp) + ALPHA * h2
    return jax.nn.log_softmax(p, axis=1)


if __name__ == "__main__":
    key = jax.random.PRNGKey(0)
    k_w1, k_b1, k_w2, k_b2, k_adj, k_feat = jax.random.split(key, 6)

    # parameters (same shapes/init scheme as the PyTorch module)
    w1 = xavier_uniform(k_w1, NE, HIDDEN)
    b1 = bias_uniform(k_b1, HIDDEN)
    w2 = xavier_uniform(k_w2, HIDDEN, LABELS)
    b2 = bias_uniform(k_b2, LABELS)

    # random symmetric binary adjacency (no self loops), then normalize
    upper = (jax.random.uniform(k_adj, (NU, NU)) < 0.1).astype(jnp.float32)
    upper = jnp.triu(upper, k=1)
    a = upper + upper.T
    a_hat = normalize_adjacency(a)

    # a batch of sparse feature matrices given as (indices, values), densified
    nnz = 256
    x_list = []
    for b in range(BATCH):
        k_feat, k_r, k_c, k_v = jax.random.split(k_feat, 4)
        rows = jax.random.randint(k_r, (nnz,), 0, NU)
        cols = jax.random.randint(k_c, (nnz,), 0, NE)
        vals = jax.random.uniform(k_v, (nnz,), jnp.float32)
        x_list.append(densify_features(jnp.stack([rows, cols], 0), vals, NU, NE))
    x_batch = jnp.stack(x_list, axis=0)  # [BATCH, NU, NE]

    preds = appnp_forward(x_batch, w1, b1, w2, b2, a_hat)
    jax.block_until_ready(preds)

    assert preds.shape == (BATCH, NU, LABELS)
    # sanity: log_softmax rows sum (in prob space) to ~1
    assert bool(jnp.allclose(jnp.exp(preds).sum(axis=-1), 1.0, atol=1e-3))
    # correctness vs. f32 reference (kernel is all-f32 now -> tight tolerance)
    ref = jnp.stack([appnp_reference(x_batch[b], w1, b1, w2, b2, a_hat)
                     for b in range(BATCH)], axis=0)
    assert bool(jnp.allclose(preds, ref, atol=5e-3))
    print("KERNEL_OK")
</pallas_src>

<mosaic_0001>
module attributes {stable_mosaic.version = 11 : i64} {
  func.func @appnp_kernel(%arg0: memref<128x32xf32, #tpu.memory_space<vmem>>, %arg1: memref<32x32xf32, #tpu.memory_space<vmem>>, %arg2: memref<1x32xf32, #tpu.memory_space<vmem>>, %arg3: memref<32x8xf32, #tpu.memory_space<vmem>>, %arg4: memref<1x8xf32, #tpu.memory_space<vmem>>, %arg5: memref<64x64xf32, #tpu.memory_space<vmem>>, %arg6: memref<2x8x64xf32, #tpu.memory_space<vmem>>) attributes {dimension_semantics = [], scalar_prefetch = 0 : i64, scratch_operands = 0 : i64, tpu.core_type = #tpu.core_type<tc>} {
    %c0 = arith.constant 0 : index
    %c0_0 = arith.constant 0 : index
    %0 = vector.load %arg0[%c0, %c0_0] : memref<128x32xf32, #tpu.memory_space<vmem>>, vector<128x32xf32>
    %c0_1 = arith.constant 0 : index
    %c0_2 = arith.constant 0 : index
    %1 = vector.load %arg1[%c0_1, %c0_2] : memref<32x32xf32, #tpu.memory_space<vmem>>, vector<32x32xf32>
    %cst = arith.constant dense<0.000000e+00> : vector<128x32xf32>
    %2 = tpu.matmul %0, %1, %cst {dimension_numbers = #tpu.dot_dimension_numbers<[1], [0], [0], [1], [0, 0, 1, 1], [], []>} : vector<128x32xf32>, vector<32x32xf32>, vector<128x32xf32> -> vector<128x32xf32>
    %c0_3 = arith.constant 0 : index
    %c0_4 = arith.constant 0 : index
    %3 = vector.load %arg2[%c0_3, %c0_4] : memref<1x32xf32, #tpu.memory_space<vmem>>, vector<1x32xf32>
    %4 = vector.broadcast %3 : vector<1x32xf32> to vector<128x32xf32>
    %5 = arith.addf %2, %4 : vector<128x32xf32>
    %cst_5 = arith.constant 0.000000e+00 : f32
    %6 = vector.broadcast %cst_5 : f32 to vector<128x32xf32>
    %7 = arith.maximumf %5, %6 : vector<128x32xf32>
    %c0_6 = arith.constant 0 : index
    %c0_7 = arith.constant 0 : index
    %8 = vector.load %arg3[%c0_6, %c0_7] : memref<32x8xf32, #tpu.memory_space<vmem>>, vector<32x8xf32>
    %cst_8 = arith.constant dense<0.000000e+00> : vector<128x8xf32>
    %9 = tpu.matmul %7, %8, %cst_8 {dimension_numbers = #tpu.dot_dimension_numbers<[1], [0], [0], [1], [0, 0, 1, 1], [], []>} : vector<128x32xf32>, vector<32x8xf32>, vector<128x8xf32> -> vector<128x8xf32>
    %c0_9 = arith.constant 0 : index
    %c0_10 = arith.constant 0 : index
    %10 = vector.load %arg4[%c0_9, %c0_10] : memref<1x8xf32, #tpu.memory_space<vmem>>, vector<1x8xf32>
    %11 = vector.broadcast %10 : vector<1x8xf32> to vector<128x8xf32>
    %12 = arith.addf %9, %11 : vector<128x8xf32>
    %13 = vector.extract_strided_slice %12 {offsets = [0, 0], sizes = [64, 8], strides = [1, 1]} : vector<128x8xf32> to vector<64x8xf32>
    %14 = tpu.transpose %13, [1, 0] : vector<64x8xf32> -> vector<8x64xf32>
    %15 = vector.extract_strided_slice %12 {offsets = [64, 0], sizes = [64, 8], strides = [1, 1]} : vector<128x8xf32> to vector<64x8xf32>
    %16 = tpu.transpose %15, [1, 0] : vector<64x8xf32> -> vector<8x64xf32>
    %17 = tpu.concatenate %14, %16 in 0 : vector<8x64xf32>, vector<8x64xf32> -> vector<16x64xf32>
    %c0_11 = arith.constant 0 : index
    %c0_12 = arith.constant 0 : index
    %18 = vector.load %arg5[%c0_11, %c0_12] : memref<64x64xf32, #tpu.memory_space<vmem>>, vector<64x64xf32>
    %19 = tpu.transpose %18, [1, 0] : vector<64x64xf32> -> vector<64x64xf32>
    %cst_13 = arith.constant 0.899999976 : f32
    %20 = vector.broadcast %cst_13 : f32 to vector<64x64xf32>
    %21 = arith.mulf %20, %19 : vector<64x64xf32>
    %cst_14 = arith.constant 1.000000e-01 : f32
    %22 = vector.broadcast %cst_14 : f32 to vector<16x64xf32>
    %23 = arith.mulf %22, %17 : vector<16x64xf32>
    %c0_i32 = arith.constant 0 : i32
    %cst_15 = arith.constant dense<0.000000e+00> : vector<16x64xf32>
    %24 = tpu.matmul %17, %21, %cst_15 {dimension_numbers = #tpu.dot_dimension_numbers<[1], [0], [0], [1], [0, 0, 1, 1], [], []>} : vector<16x64xf32>, vector<64x64xf32>, vector<16x64xf32> -> vector<16x64xf32>
    %25 = arith.addf %24, %23 : vector<16x64xf32>
    %c1_i32 = arith.constant 1 : i32
    %cst_16 = arith.constant dense<0.000000e+00> : vector<16x64xf32>
    %26 = tpu.matmul %25, %21, %cst_16 {dimension_numbers = #tpu.dot_dimension_numbers<[1], [0], [0], [1], [0, 0, 1, 1], [], []>} : vector<16x64xf32>, vector<64x64xf32>, vector<16x64xf32> -> vector<16x64xf32>
    %27 = arith.addf %26, %23 : vector<16x64xf32>
    %c2_i32 = arith.constant 2 : i32
    %cst_17 = arith.constant dense<0.000000e+00> : vector<16x64xf32>
    %28 = tpu.matmul %27, %21, %cst_17 {dimension_numbers = #tpu.dot_dimension_numbers<[1], [0], [0], [1], [0, 0, 1, 1], [], []>} : vector<16x64xf32>, vector<64x64xf32>, vector<16x64xf32> -> vector<16x64xf32>
    %29 = arith.addf %28, %23 : vector<16x64xf32>
    %c3_i32 = arith.constant 3 : i32
    %cst_18 = arith.constant dense<0.000000e+00> : vector<16x64xf32>
    %30 = tpu.matmul %29, %21, %cst_18 {dimension_numbers = #tpu.dot_dimension_numbers<[1], [0], [0], [1], [0, 0, 1, 1], [], []>} : vector<16x64xf32>, vector<64x64xf32>, vector<16x64xf32> -> vector<16x64xf32>
    %31 = arith.addf %30, %23 : vector<16x64xf32>
    %c4_i32 = arith.constant 4 : i32
    %cst_19 = arith.constant dense<0.000000e+00> : vector<16x64xf32>
    %32 = tpu.matmul %31, %21, %cst_19 {dimension_numbers = #tpu.dot_dimension_numbers<[1], [0], [0], [1], [0, 0, 1, 1], [], []>} : vector<16x64xf32>, vector<64x64xf32>, vector<16x64xf32> -> vector<16x64xf32>
    %33 = arith.addf %32, %23 : vector<16x64xf32>
    %c5_i32 = arith.constant 5 : i32
    %cst_20 = arith.constant dense<0.000000e+00> : vector<16x64xf32>
    %34 = tpu.matmul %33, %21, %cst_20 {dimension_numbers = #tpu.dot_dimension_numbers<[1], [0], [0], [1], [0, 0, 1, 1], [], []>} : vector<16x64xf32>, vector<64x64xf32>, vector<16x64xf32> -> vector<16x64xf32>
    %35 = arith.addf %34, %23 : vector<16x64xf32>
    %c6_i32 = arith.constant 6 : i32
    %cst_21 = arith.constant dense<0.000000e+00> : vector<16x64xf32>
    %36 = tpu.matmul %35, %21, %cst_21 {dimension_numbers = #tpu.dot_dimension_numbers<[1], [0], [0], [1], [0, 0, 1, 1], [], []>} : vector<16x64xf32>, vector<64x64xf32>, vector<16x64xf32> -> vector<16x64xf32>
    %37 = arith.addf %36, %23 : vector<16x64xf32>
    %c7_i32 = arith.constant 7 : i32
    %cst_22 = arith.constant dense<0.000000e+00> : vector<16x64xf32>
    %38 = tpu.matmul %37, %21, %cst_22 {dimension_numbers = #tpu.dot_dimension_numbers<[1], [0], [0], [1], [0, 0, 1, 1], [], []>} : vector<16x64xf32>, vector<64x64xf32>, vector<16x64xf32> -> vector<16x64xf32>
    %39 = arith.addf %38, %23 : vector<16x64xf32>
    %c8_i32 = arith.constant 8 : i32
    %cst_23 = arith.constant dense<0.000000e+00> : vector<16x64xf32>
    %40 = tpu.matmul %39, %21, %cst_23 {dimension_numbers = #tpu.dot_dimension_numbers<[1], [0], [0], [1], [0, 0, 1, 1], [], []>} : vector<16x64xf32>, vector<64x64xf32>, vector<16x64xf32> -> vector<16x64xf32>
    %41 = arith.addf %40, %23 : vector<16x64xf32>
    %c9_i32 = arith.constant 9 : i32
    %cst_24 = arith.constant dense<0.000000e+00> : vector<16x64xf32>
    %42 = tpu.matmul %41, %21, %cst_24 {dimension_numbers = #tpu.dot_dimension_numbers<[1], [0], [0], [1], [0, 0, 1, 1], [], []>} : vector<16x64xf32>, vector<64x64xf32>, vector<16x64xf32> -> vector<16x64xf32>
    %43 = arith.addf %42, %23 : vector<16x64xf32>
    %44 = vector.extract_strided_slice %43 {offsets = [0, 0], sizes = [8, 64], strides = [1, 1]} : vector<16x64xf32> to vector<8x64xf32>
    %cst_25 = arith.constant dense<0xFF800000> : vector<64xf32>
    %45 = vector.multi_reduction <maximumf>, %44, %cst_25 [0] : vector<8x64xf32> to vector<64xf32>
    %46 = vector.shape_cast %45 : vector<64xf32> to vector<1x64xf32>
    %47 = vector.broadcast %46 : vector<1x64xf32> to vector<8x64xf32>
    %48 = arith.subf %44, %47 : vector<8x64xf32>
    %49 = math.exp %48 : vector<8x64xf32>
    %cst_26 = arith.constant dense<0.000000e+00> : vector<64xf32>
    %50 = vector.multi_reduction <add>, %49, %cst_26 [0] : vector<8x64xf32> to vector<64xf32>
    %51 = vector.shape_cast %50 : vector<64xf32> to vector<1x64xf32>
    %52 = math.log %51 : vector<1x64xf32>
    %53 = vector.broadcast %52 : vector<1x64xf32> to vector<8x64xf32>
    %54 = arith.subf %48, %53 : vector<8x64xf32>
    %c0_27 = arith.constant 0 : index
    %c0_28 = arith.constant 0 : index
    %c0_29 = arith.constant 0 : index
    %55 = vector.load %arg6[%c0_27, %c0_28, %c0_29] : memref<2x8x64xf32, #tpu.memory_space<vmem>>, vector<1x8x64xf32>
    %56 = vector.shape_cast %55 : vector<1x8x64xf32> to vector<8x64xf32>
    %57 = vector.shape_cast %54 : vector<8x64xf32> to vector<1x8x64xf32>
    tpu.vector_store %arg6[%c0_27, %c0_28, %c0_29], %57 {strides = array<i32>} : memref<2x8x64xf32, #tpu.memory_space<vmem>>, vector<1x8x64xf32>,
    %58 = vector.extract_strided_slice %43 {offsets = [8, 0], sizes = [8, 64], strides = [1, 1]} : vector<16x64xf32> to vector<8x64xf32>
    %cst_30 = arith.constant dense<0xFF800000> : vector<64xf32>
    %59 = vector.multi_reduction <maximumf>, %58, %cst_30 [0] : vector<8x64xf32> to vector<64xf32>
    %60 = vector.shape_cast %59 : vector<64xf32> to vector<1x64xf32>
    %61 = vector.broadcast %60 : vector<1x64xf32> to vector<8x64xf32>
    %62 = arith.subf %58, %61 : vector<8x64xf32>
    %63 = math.exp %62 : vector<8x64xf32>
    %cst_31 = arith.constant dense<0.000000e+00> : vector<64xf32>
    %64 = vector.multi_reduction <add>, %63, %cst_31 [0] : vector<8x64xf32> to vector<64xf32>
    %65 = vector.shape_cast %64 : vector<64xf32> to vector<1x64xf32>
    %66 = math.log %65 : vector<1x64xf32>
    %67 = vector.broadcast %66 : vector<1x64xf32> to vector<8x64xf32>
    %68 = arith.subf %62, %67 : vector<8x64xf32>
    %c1 = arith.constant 1 : index
    %c0_32 = arith.constant 0 : index
    %c0_33 = arith.constant 0 : index
    %69 = vector.load %arg6[%c1, %c0_32, %c0_33] : memref<2x8x64xf32, #tpu.memory_space<vmem>>, vector<1x8x64xf32>
    %70 = vector.shape_cast %69 : vector<1x8x64xf32> to vector<8x64xf32>
    %71 = vector.shape_cast %68 : vector<8x64xf32> to vector<1x8x64xf32>
    tpu.vector_store %arg6[%c1, %c0_32, %c0_33], %71 {strides = array<i32>} : memref<2x8x64xf32, #tpu.memory_space<vmem>>, vector<1x8x64xf32>,
    return
  }
}

</mosaic_0001>

<llo_original>
// kernel: tpu_custom_call.1
$region0: #{tpu_custom_call.1}
  #allocation0 [shape = 'u32[]', space=smem, size = 0x4, offset = 0x4, fixed_abs, tag = 'smem constant byte address 0x4 - core index']
  #allocation1 [shape = 'u32[144,128]{1,0:T(1,128)}', space=vmem, size = 0x12000, scoped, tag = 'internal scratch']
  %s0 = inlined_call_operand.vmem [shape: f32[128,32], index: 0, kind: input, shape index: {}]
  %s1 = inlined_call_operand.vmem [shape: f32[32,32], index: 1, kind: input, shape index: {}]
  %s2 = inlined_call_operand.vmem [shape: f32[1,32], index: 2, kind: input, shape index: {}]
  %s3 = inlined_call_operand.vmem [shape: f32[32,8], index: 3, kind: input, shape index: {}]
  %s4 = inlined_call_operand.vmem [shape: f32[1,8], index: 4, kind: input, shape index: {}]
  %s5 = inlined_call_operand.vmem [shape: f32[64,64], index: 5, kind: input, shape index: {}]
  %s6 = inlined_call_operand.hbm [shape: f32[2,8,64], index: 6, kind: output, shape index: {}]
  %s7 = sld [smem:[#allocation0]]
  $region34: #{tpu_custom_call.1} parent=0
    _
  %s9 = ssub.s32 1, %s7
  %s10 = scalar_select 0, %s9, %s7
  $region1: #{tpu_custom_call.1} parent=0
    #allocation2 [shape = 'u8[8192]{0}', space=vmem, size = 0x2000, scoped, tag = 'output window, operand 0, single buffered']
    #allocation3 [shape = 's32[1]{0}', space=sflag, size = 0x4, scoped, tag = 'scoped memory for tpu_custom_call.1']
    %11 = vsyncpa [#allocation3], 0
    // Predicated region
    $region2: #{tpu_custom_call.1} parent=1 // pred_check
      _
    $region3: #{tpu_custom_call.1} parent=1 // pred_check_branch
      %13 = sbr.rel (0) target = $region5
    $region4: #{tpu_custom_call.1} parent=1 // pred_region
      _
    $region5: #{tpu_custom_call.1} parent=1 // pred_fallthru
      _
    // Predicated region
    $region6: #{tpu_custom_call.1} parent=1 // pred_check
      _
    $region7: #{tpu_custom_call.1} parent=1 // pred_check_branch
      %15 = sbr.rel (0) target = $region9
    $region8: #{tpu_custom_call.1} parent=1 // pred_region
      _
    $region9: #{tpu_custom_call.1} parent=1 // pred_fallthru
      _
    // Predicated region
    $region10: #{tpu_custom_call.1} parent=1 // pred_check
      _
    $region11: #{tpu_custom_call.1} parent=1 // pred_check_branch
      %17 = sbr.rel (0) target = $region13
    $region12: #{tpu_custom_call.1} parent=1 // pred_region
      _
    $region13: #{tpu_custom_call.1} parent=1 // pred_fallthru
      _
    // Predicated region
    $region14: #{tpu_custom_call.1} parent=1 // pred_check
      _
    $region15: #{tpu_custom_call.1} parent=1 // pred_check_branch
      %19 = sbr.rel (0) target = $region17
    $region16: #{tpu_custom_call.1} parent=1 // pred_region
      _
    $region17: #{tpu_custom_call.1} parent=1 // pred_fallthru
      _
    // Predicated region
    $region18: #{tpu_custom_call.1} parent=1 // pred_check
      _
    $region19: #{tpu_custom_call.1} parent=1 // pred_check_branch
      %21 = sbr.rel (0) target = $region21
    $region20: #{tpu_custom_call.1} parent=1 // pred_region
      _
    $region21: #{tpu_custom_call.1} parent=1 // pred_fallthru
      _
    // Predicated region
    $region22: #{tpu_custom_call.1} parent=1 // pred_check
      _
    $region23: #{tpu_custom_call.1} parent=1 // pred_check_branch
      %23 = sbr.rel (0) target = $region25
    $region24: #{tpu_custom_call.1} parent=1 // pred_region
      _
    $region25: #{tpu_custom_call.1} parent=1 // pred_fallthru
      _
    %v24 = vld [vmem:[%s0] sm:$0xff]
    %v25 = vld [vmem:[%s0 + $0x8] sm:$0xff]
    %v26 = vld [vmem:[%s0 + $0x10] sm:$0xff]
    %v27 = vld [vmem:[%s0 + $0x18] sm:$0xff]
    %v28 = vld [vmem:[%s0 + $0x20] sm:$0xff]
    %v29 = vld [vmem:[%s0 + $0x28] sm:$0xff]
    %v30 = vld [vmem:[%s0 + $0x30] sm:$0xff]
    %v31 = vld [vmem:[%s0 + $0x38] sm:$0xff]
    %v32 = vld [vmem:[%s0 + $0x40] sm:$0xff]
    %v33 = vld [vmem:[%s0 + $0x48] sm:$0xff]
    %v34 = vld [vmem:[%s0 + $0x50] sm:$0xff]
    %v35 = vld [vmem:[%s0 + $0x58] sm:$0xff]
    %v36 = vld [vmem:[%s0 + $0x60] sm:$0xff]
    %v37 = vld [vmem:[%s0 + $0x68] sm:$0xff]
    %v38 = vld [vmem:[%s0 + $0x70] sm:$0xff]
    %v39 = vld [vmem:[%s0 + $0x78] sm:$0xff]
    %v40 = vld [vmem:[%s1] sm:$0xff]
    %v41 = vld [vmem:[%s1 + $0x8] sm:$0xff]
    %v42 = vld [vmem:[%s1 + $0x10] sm:$0xff]
    %v43 = vld [vmem:[%s1 + $0x18] sm:$0xff]
    %v44 = vld [vmem:[%s2] sm:$0x1]
    %v46 = vlaneseq
    %v47 = vshrl.u32 %v46, 7
    %v48 = vsub.s32 0, %v47
    %v49 = vrot.slane %v44, %v48
    %vm51 = vcmask 261120
    %v53 = vsel %vm51, %v24, 0
    %v56 = vsel %vm51, %v25, 0
    %v59 = vsel %vm51, %v26, 0
    %v62 = vsel %vm51, %v27, 0
    %v65 = vsel %vm51, %v28, 0
    %v68 = vsel %vm51, %v29, 0
    %v71 = vsel %vm51, %v30, 0
    %v74 = vsel %vm51, %v31, 0
    %v77 = vsel %vm51, %v32, 0
    %v80 = vsel %vm51, %v33, 0
    %v83 = vsel %vm51, %v34, 0
    %v86 = vsel %vm51, %v35, 0
    %v89 = vsel %vm51, %v36, 0
    %v92 = vsel %vm51, %v37, 0
    %v95 = vsel %vm51, %v38, 0
    %v98 = vsel %vm51, %v39, 0
    %100 = vmatprep.subr.mxu0 0.0
    %101 = vmatpush1.msra.mxu0 0.0
    %102 = vmatprep.subr.mxu0 0.0
    %103 = vmatpush1.msra.mxu0 0.0
    %104 = vmatprep.subr.mxu0 0.0
    %105 = vmatpush1.msra.mxu0 0.0
    %106 = vmatprep.subr.mxu0 0.0
    %107 = vmatpush1.msra.mxu0 0.0
    %108 = vmatprep.subr.mxu0 0.0
    %109 = vmatpush1.msra.mxu0 0.0
    %110 = vmatprep.subr.mxu0 0.0
    %111 = vmatpush1.msra.mxu0 0.0
    %112 = vmatprep.subr.mxu0 0.0
    %113 = vmatpush1.msra.mxu0 0.0
    %114 = vmatprep.subr.mxu0 0.0
    %115 = vmatpush1.msra.mxu0 0.0
    %116 = vmatprep.subr.mxu0 0.0
    %117 = vmatpush1.msra.mxu0 0.0
    %118 = vmatprep.subr.mxu0 0.0
    %119 = vmatpush1.msra.mxu0 0.0
    %120 = vmatprep.subr.mxu0 0.0
    %121 = vmatpush1.msra.mxu0 0.0
    %122 = vmatprep.subr.mxu0 0.0
    %123 = vmatpush1.msra.mxu0 0.0
    %124 = vmatprep.subr.mxu0 0.0
    %125 = vmatpush1.msra.mxu0 %v43
    %126 = vmatprep.subr.mxu0 0.0
    %127 = vmatpush1.msra.mxu0 %v42
    %128 = vmatprep.subr.mxu0 0.0
    %129 = vmatpush1.msra.mxu0 %v41
    %130 = vmatprep.subr.mxu0 0.0
    %131 = vmatpush1.msra.mxu0 %v40
    %132 = vmatprep.subr.mxu0 0.0
    %133 = vmatpush2.msra.mxu0 0.0
    %134 = vmatprep.subr.mxu0 0.0
    %135 = vmatpush2.msra.mxu0 0.0
    %136 = vmatprep.subr.mxu0 0.0
    %137 = vmatpush2.msra.mxu0 0.0
    %138 = vmatprep.subr.mxu0 0.0
    %139 = vmatpush2.msra.mxu0 0.0
    %140 = vmatprep.subr.mxu0 0.0
    %141 = vmatpush2.msra.mxu0 0.0
    %142 = vmatprep.subr.mxu0 0.0
    %143 = vmatpush2.msra.mxu0 0.0
    %144 = vmatprep.subr.mxu0 0.0
    %145 = vmatpush2.msra.mxu0 0.0
    %146 = vmatprep.subr.mxu0 0.0
    %147 = vmatpush2.msra.mxu0 0.0
    %148 = vmatprep.subr.mxu0 0.0
    %149 = vmatpush2.msra.mxu0 0.0
    %150 = vmatprep.subr.mxu0 0.0
    %151 = vmatpush2.msra.mxu0 0.0
    %152 = vmatprep.subr.mxu0 0.0
    %153 = vmatpush2.msra.mxu0 0.0
    %154 = vmatprep.subr.mxu0 0.0
    %155 = vmatpush2.msra.mxu0 0.0
    %156 = vmatprep.subr.mxu0 0.0
    %157 = vmatpush2.msra.mxu0 0.0
    %158 = vmatprep.subr.mxu0 0.0
    %159 = vmatpush2.msra.mxu0 0.0
    %160 = vmatprep.subr.mxu0 0.0
    %161 = vmatpush2.msra.mxu0 0.0
    %162 = vmatprep.subr.mxu0 0.0
    %163 = vmatpush2.msra.mxu0 0.0
    %164 = vmatprep.mubr.f32.mxu0 0.0
    %165 = vmatmul.mubr.f32.gmra.mxu0 %v53
    %v166 = vpop.f32.mrf.mxu0
    %v167 = vadd.f32 %v49, %v166
    %v168 = vpop.f32.mrf.mxu0
    %169 = vmatprep.mubr.f32.mxu0 0.0
    %170 = vmatmul.mubr.f32.gmra.mxu0 %v56
    %v171 = vpop.f32.mrf.mxu0
    %v172 = vadd.f32 %v49, %v171
    %v173 = vpop.f32.mrf.mxu0
    %174 = vmatprep.mubr.f32.mxu0 0.0
    %175 = vmatmul.mubr.f32.gmra.mxu0 %v59
    %v176 = vpop.f32.mrf.mxu0
    %v177 = vadd.f32 %v49, %v176
    %v178 = vpop.f32.mrf.mxu0
    %179 = vmatprep.mubr.f32.mxu0 0.0
    %180 = vmatmul.mubr.f32.gmra.mxu0 %v62
    %v181 = vpop.f32.mrf.mxu0
    %v182 = vadd.f32 %v49, %v181
    %v183 = vpop.f32.mrf.mxu0
    %184 = vmatprep.mubr.f32.mxu0 0.0
    %185 = vmatmul.mubr.f32.gmra.mxu0 %v65
    %v186 = vpop.f32.mrf.mxu0
    %v187 = vadd.f32 %v49, %v186
    %v188 = vpop.f32.mrf.mxu0
    %189 = vmatprep.mubr.f32.mxu0 0.0
    %190 = vmatmul.mubr.f32.gmra.mxu0 %v68
    %v191 = vpop.f32.mrf.mxu0
    %v192 = vadd.f32 %v49, %v191
    %v193 = vpop.f32.mrf.mxu0
    %194 = vmatprep.mubr.f32.mxu0 0.0
    %195 = vmatmul.mubr.f32.gmra.mxu0 %v71
    %v196 = vpop.f32.mrf.mxu0
    %v197 = vadd.f32 %v49, %v196
    %v198 = vpop.f32.mrf.mxu0
    %199 = vmatprep.mubr.f32.mxu0 0.0
    %200 = vmatmul.mubr.f32.gmra.mxu0 %v74
    %v201 = vpop.f32.mrf.mxu0
    %v202 = vadd.f32 %v49, %v201
    %v203 = vpop.f32.mrf.mxu0
    %204 = vmatprep.mubr.f32.mxu0 0.0
    %205 = vmatmul.mubr.f32.gmra.mxu0 %v77
    %v206 = vpop.f32.mrf.mxu0
    %v207 = vadd.f32 %v49, %v206
    %v208 = vpop.f32.mrf.mxu0
    %209 = vmatprep.mubr.f32.mxu0 0.0
    %210 = vmatmul.mubr.f32.gmra.mxu0 %v80
    %v211 = vpop.f32.mrf.mxu0
    %v212 = vadd.f32 %v49, %v211
    %v213 = vpop.f32.mrf.mxu0
    %214 = vmatprep.mubr.f32.mxu0 0.0
    %215 = vmatmul.mubr.f32.gmra.mxu0 %v83
    %v216 = vpop.f32.mrf.mxu0
    %v217 = vadd.f32 %v49, %v216
    %v218 = vpop.f32.mrf.mxu0
    %219 = vmatprep.mubr.f32.mxu0 0.0
    %220 = vmatmul.mubr.f32.gmra.mxu0 %v86
    %v221 = vpop.f32.mrf.mxu0
    %v222 = vadd.f32 %v49, %v221
    %v223 = vpop.f32.mrf.mxu0
    %224 = vmatprep.mubr.f32.mxu0 0.0
    %225 = vmatmul.mubr.f32.gmra.mxu0 %v89
    %v226 = vpop.f32.mrf.mxu0
    %v227 = vadd.f32 %v49, %v226
    %v228 = vpop.f32.mrf.mxu0
    %229 = vmatprep.mubr.f32.mxu0 0.0
    %230 = vmatmul.mubr.f32.gmra.mxu0 %v92
    %v231 = vpop.f32.mrf.mxu0
    %v232 = vadd.f32 %v49, %v231
    %v233 = vpop.f32.mrf.mxu0
    %234 = vmatprep.mubr.f32.mxu0 0.0
    %235 = vmatmul.mubr.f32.gmra.mxu0 %v95
    %v236 = vpop.f32.mrf.mxu0
    %v237 = vadd.f32 %v49, %v236
    %v238 = vpop.f32.mrf.mxu0
    %239 = vmatprep.mubr.f32.mxu0 0.0
    %240 = vmatmul.mubr.f32.gmra.mxu0 %v98
    %v241 = vpop.f32.mrf.mxu0
    %v242 = vadd.f32 %v49, %v241
    %v243 = vpop.f32.mrf.mxu0
    %244 = vdwg.mxu0
    %v245 = vmax.f32 %v167, 0.0
    %v246 = vmax.f32 %v172, 0.0
    %v247 = vmax.f32 %v177, 0.0
    %v248 = vmax.f32 %v182, 0.0
    %v249 = vmax.f32 %v187, 0.0
    %v250 = vmax.f32 %v192, 0.0
    %v251 = vmax.f32 %v197, 0.0
    %v252 = vmax.f32 %v202, 0.0
    %v253 = vmax.f32 %v207, 0.0
    %v254 = vmax.f32 %v212, 0.0
    %v255 = vmax.f32 %v217, 0.0
    %v256 = vmax.f32 %v222, 0.0
    %v257 = vmax.f32 %v227, 0.0
    %v258 = vmax.f32 %v232, 0.0
    %v259 = vmax.f32 %v237, 0.0
    %v260 = vmax.f32 %v242, 0.0
    %v261 = vld [vmem:[%s3] sm:$0xff]
    %v262 = vld [vmem:[%s3 + $0x8] sm:$0xff]
    %v263 = vld [vmem:[%s3 + $0x10] sm:$0xff]
    %v264 = vld [vmem:[%s3 + $0x18] sm:$0xff]
    %v265 = vld [vmem:[%s4] sm:$0x1]
    %v267 = vlaneseq
    %v268 = vshrl.u32 %v267, 7
    %v269 = vsub.s32 0, %v268
    %v270 = vrot.slane %v265, %v269
    %v273 = vsel %vm51, %v245, 0
    %v276 = vsel %vm51, %v246, 0
    %v279 = vsel %vm51, %v247, 0
    %v282 = vsel %vm51, %v248, 0
    %v285 = vsel %vm51, %v249, 0
    %v288 = vsel %vm51, %v250, 0
    %v291 = vsel %vm51, %v251, 0
    %v294 = vsel %vm51, %v252, 0
    %v297 = vsel %vm51, %v253, 0
    %v300 = vsel %vm51, %v254, 0
    %v303 = vsel %vm51, %v255, 0
    %v306 = vsel %vm51, %v256, 0
    %v309 = vsel %vm51, %v257, 0
    %v312 = vsel %vm51, %v258, 0
    %v315 = vsel %vm51, %v259, 0
    %v318 = vsel %vm51, %v260, 0
    %320 = vmatprep.subr.mxu0 0.0
    %321 = vmatpush1.msra.mxu0 0.0
    %322 = vmatprep.subr.mxu0 0.0
    %323 = vmatpush1.msra.mxu0 0.0
    %324 = vmatprep.subr.mxu0 0.0
    %325 = vmatpush1.msra.mxu0 0.0
    %326 = vmatprep.subr.mxu0 0.0
    %327 = vmatpush1.msra.mxu0 0.0
    %328 = vmatprep.subr.mxu0 0.0
    %329 = vmatpush1.msra.mxu0 0.0
    %330 = vmatprep.subr.mxu0 0.0
    %331 = vmatpush1.msra.mxu0 0.0
    %332 = vmatprep.subr.mxu0 0.0
    %333 = vmatpush1.msra.mxu0 0.0
    %334 = vmatprep.subr.mxu0 0.0
    %335 = vmatpush1.msra.mxu0 0.0
    %336 = vmatprep.subr.mxu0 0.0
    %337 = vmatpush1.msra.mxu0 0.0
    %338 = vmatprep.subr.mxu0 0.0
    %339 = vmatpush1.msra.mxu0 0.0
    %340 = vmatprep.subr.mxu0 0.0
    %341 = vmatpush1.msra.mxu0 0.0
    %342 = vmatprep.subr.mxu0 0.0
    %343 = vmatpush1.msra.mxu0 0.0
    %344 = vmatprep.subr.mxu0 0.0
    %345 = vmatpush1.msra.mxu0 %v264
    %346 = vmatprep.subr.mxu0 0.0
    %347 = vmatpush1.msra.mxu0 %v263
    %348 = vmatprep.subr.mxu0 0.0
    %349 = vmatpush1.msra.mxu0 %v262
    %350 = vmatprep.subr.mxu0 0.0
    %351 = vmatpush1.msra.mxu0 %v261
    %352 = vmatprep.subr.mxu0 0.0
    %353 = vmatpush2.msra.mxu0 0.0
    %354 = vmatprep.subr.mxu0 0.0
    %355 = vmatpush2.msra.mxu0 0.0
    %356 = vmatprep.subr.mxu0 0.0
    %357 = vmatpush2.msra.mxu0 0.0
    %358 = vmatprep.subr.mxu0 0.0
    %359 = vmatpush2.msra.mxu0 0.0
    %360 = vmatprep.subr.mxu0 0.0
    %361 = vmatpush2.msra.mxu0 0.0
    %362 = vmatprep.subr.mxu0 0.0
    %363 = vmatpush2.msra.mxu0 0.0
    %364 = vmatprep.subr.mxu0 0.0
    %365 = vmatpush2.msra.mxu0 0.0
    %366 = vmatprep.subr.mxu0 0.0
    %367 = vmatpush2.msra.mxu0 0.0
    %368 = vmatprep.subr.mxu0 0.0
    %369 = vmatpush2.msra.mxu0 0.0
    %370 = vmatprep.subr.mxu0 0.0
    %371 = vmatpush2.msra.mxu0 0.0
    %372 = vmatprep.subr.mxu0 0.0
    %373 = vmatpush2.msra.mxu0 0.0
    %374 = vmatprep.subr.mxu0 0.0
    %375 = vmatpush2.msra.mxu0 0.0
    %376 = vmatprep.subr.mxu0 0.0
    %377 = vmatpush2.msra.mxu0 0.0
    %378 = vmatprep.subr.mxu0 0.0
    %379 = vmatpush2.msra.mxu0 0.0
    %380 = vmatprep.subr.mxu0 0.0
    %381 = vmatpush2.msra.mxu0 0.0
    %382 = vmatprep.subr.mxu0 0.0
    %383 = vmatpush2.msra.mxu0 0.0
    %384 = vmatprep.mubr.f32.mxu0 0.0
    %385 = vmatmul.mubr.f32.gmra.mxu0 %v273
    %v386 = vpop.f32.mrf.mxu0
    %v387 = vadd.f32 %v270, %v386
    %v388 = vpop.f32.mrf.mxu0
    %389 = vmatprep.mubr.f32.mxu0 0.0
    %390 = vmatmul.mubr.f32.gmra.mxu0 %v276
    %v391 = vpop.f32.mrf.mxu0
    %v392 = vadd.f32 %v270, %v391
    %v393 = vpop.f32.mrf.mxu0
    %394 = vmatprep.mubr.f32.mxu0 0.0
    %395 = vmatmul.mubr.f32.gmra.mxu0 %v279
    %v396 = vpop.f32.mrf.mxu0
    %v397 = vadd.f32 %v270, %v396
    %v398 = vpop.f32.mrf.mxu0
    %399 = vmatprep.mubr.f32.mxu0 0.0
    %400 = vmatmul.mubr.f32.gmra.mxu0 %v282
    %v401 = vpop.f32.mrf.mxu0
    %v402 = vadd.f32 %v270, %v401
    %v403 = vpop.f32.mrf.mxu0
    %404 = vmatprep.mubr.f32.mxu0 0.0
    %405 = vmatmul.mubr.f32.gmra.mxu0 %v285
    %v406 = vpop.f32.mrf.mxu0
    %v407 = vadd.f32 %v270, %v406
    %v408 = vpop.f32.mrf.mxu0
    %409 = vmatprep.mubr.f32.mxu0 0.0
    %410 = vmatmul.mubr.f32.gmra.mxu0 %v288
    %v411 = vpop.f32.mrf.mxu0
    %v412 = vadd.f32 %v270, %v411
    %v413 = vpop.f32.mrf.mxu0
    %414 = vmatprep.mubr.f32.mxu0 0.0
    %415 = vmatmul.mubr.f32.gmra.mxu0 %v291
    %v416 = vpop.f32.mrf.mxu0
    %v417 = vadd.f32 %v270, %v416
    %v418 = vpop.f32.mrf.mxu0
    %419 = vmatprep.mubr.f32.mxu0 0.0
    %420 = vmatmul.mubr.f32.gmra.mxu0 %v294
    %v421 = vpop.f32.mrf.mxu0
    %v422 = vadd.f32 %v270, %v421
    %v423 = vpop.f32.mrf.mxu0
    %424 = vmatprep.mubr.f32.mxu0 0.0
    %425 = vmatmul.mubr.f32.gmra.mxu0 %v297
    %v426 = vpop.f32.mrf.mxu0
    %v427 = vadd.f32 %v270, %v426
    %v428 = vpop.f32.mrf.mxu0
    %429 = vmatprep.mubr.f32.mxu0 0.0
    %430 = vmatmul.mubr.f32.gmra.mxu0 %v300
    %v431 = vpop.f32.mrf.mxu0
    %v432 = vadd.f32 %v270, %v431
    %v433 = vpop.f32.mrf.mxu0
    %434 = vmatprep.mubr.f32.mxu0 0.0
    %435 = vmatmul.mubr.f32.gmra.mxu0 %v303
    %v436 = vpop.f32.mrf.mxu0
    %v437 = vadd.f32 %v270, %v436
    %v438 = vpop.f32.mrf.mxu0
    %439 = vmatprep.mubr.f32.mxu0 0.0
    %440 = vmatmul.mubr.f32.gmra.mxu0 %v306
    %v441 = vpop.f32.mrf.mxu0
    %v442 = vadd.f32 %v270, %v441
    %v443 = vpop.f32.mrf.mxu0
    %444 = vmatprep.mubr.f32.mxu0 0.0
    %445 = vmatmul.mubr.f32.gmra.mxu0 %v309
    %v446 = vpop.f32.mrf.mxu0
    %v447 = vadd.f32 %v270, %v446
    %v448 = vpop.f32.mrf.mxu0
    %449 = vmatprep.mubr.f32.mxu0 0.0
    %450 = vmatmul.mubr.f32.gmra.mxu0 %v312
    %v451 = vpop.f32.mrf.mxu0
    %v452 = vadd.f32 %v270, %v451
    %v453 = vpop.f32.mrf.mxu0
    %454 = vmatprep.mubr.f32.mxu0 0.0
    %455 = vmatmul.mubr.f32.gmra.mxu0 %v315
    %v456 = vpop.f32.mrf.mxu0
    %v457 = vadd.f32 %v270, %v456
    %v458 = vpop.f32.mrf.mxu0
    %459 = vmatprep.mubr.f32.mxu0 0.0
    %460 = vmatmul.mubr.f32.gmra.mxu0 %v318
    %v461 = vpop.f32.mrf.mxu0
    %v462 = vadd.f32 %v270, %v461
    %v463 = vpop.f32.mrf.mxu0
    %464 = vdwg.mxu0
    %465 = vxpose.xlu0.b32.start [1/16] %v387, 128
    %466 = vxpose.xlu0.b32.cont [2/16] %v392, 128
    %467 = vxpose.xlu0.b32.cont [3/16] %v397, 128
    %468 = vxpose.xlu0.b32.cont [4/16] %v402, 128
    %469 = vxpose.xlu0.b32.cont [5/16] %v407, 128
    %470 = vxpose.xlu0.b32.cont [6/16] %v412, 128
    %471 = vxpose.xlu0.b32.cont [7/16] %v417, 128
    %472 = vxpose.xlu0.b32.cont [8/16] %v422, 128
    %473 = vxpose.xlu0.b32.cont [9/16] 0.0, 128
    %474 = vxpose.xlu0.b32.cont [10/16] 0.0, 128
    %475 = vxpose.xlu0.b32.cont [11/16] 0.0, 128
    %476 = vxpose.xlu0.b32.cont [12/16] 0.0, 128
    %477 = vxpose.xlu0.b32.cont [13/16] 0.0, 128
    %478 = vxpose.xlu0.b32.cont [14/16] 0.0, 128
    %479 = vxpose.xlu0.b32.cont [15/16] 0.0, 128
    %480 = vxpose.xlu0.b32.end [16/16] 0.0, 128
    %v481 = vpop.trf.xlu0
    %v482 = vpop.trf.xlu0
    %v483 = vpop.trf.xlu0
    %v484 = vpop.trf.xlu0
    %v485 = vpop.trf.xlu0
    %v486 = vpop.trf.xlu0
    %v487 = vpop.trf.xlu0
    %v488 = vpop.trf.xlu0
    %v489 = vpop.trf.xlu0
    %v490 = vpop.trf.xlu0
    %v491 = vpop.trf.xlu0
    %v492 = vpop.trf.xlu0
    %v493 = vpop.trf.xlu0
    %v494 = vpop.trf.xlu0
    %v495 = vpop.trf.xlu0
    %v496 = vpop.trf.xlu0
    %497 = vxpose.xlu0.b32.start [1/16] %v427, 128
    %498 = vxpose.xlu0.b32.cont [2/16] %v432, 128
    %499 = vxpose.xlu0.b32.cont [3/16] %v437, 128
    %500 = vxpose.xlu0.b32.cont [4/16] %v442, 128
    %501 = vxpose.xlu0.b32.cont [5/16] %v447, 128
    %502 = vxpose.xlu0.b32.cont [6/16] %v452, 128
    %503 = vxpose.xlu0.b32.cont [7/16] %v457, 128
    %504 = vxpose.xlu0.b32.cont [8/16] %v462, 128
    %505 = vxpose.xlu0.b32.cont [9/16] 0.0, 128
    %506 = vxpose.xlu0.b32.cont [10/16] 0.0, 128
    %507 = vxpose.xlu0.b32.cont [11/16] 0.0, 128
    %508 = vxpose.xlu0.b32.cont [12/16] 0.0, 128
    %509 = vxpose.xlu0.b32.cont [13/16] 0.0, 128
    %510 = vxpose.xlu0.b32.cont [14/16] 0.0, 128
    %511 = vxpose.xlu0.b32.cont [15/16] 0.0, 128
    %512 = vxpose.xlu0.b32.end [16/16] 0.0, 128
    %v513 = vpop.trf.xlu0
    %v514 = vpop.trf.xlu0
    %v515 = vpop.trf.xlu0
    %v516 = vpop.trf.xlu0
    %v517 = vpop.trf.xlu0
    %v518 = vpop.trf.xlu0
    %v519 = vpop.trf.xlu0
    %v520 = vpop.trf.xlu0
    %v521 = vpop.trf.xlu0
    %v522 = vpop.trf.xlu0
    %v523 = vpop.trf.xlu0
    %v524 = vpop.trf.xlu0
    %v525 = vpop.trf.xlu0
    %v526 = vpop.trf.xlu0
    %v527 = vpop.trf.xlu0
    %v528 = vpop.trf.xlu0
    %v529 = vld [vmem:[%s5] sm:$0xff]
    %v530 = vld [vmem:[%s5 + $0x8] sm:$0xff]
    %v531 = vld [vmem:[%s5 + $0x10] sm:$0xff]
    %v532 = vld [vmem:[%s5 + $0x18] sm:$0xff]
    %v533 = vld [vmem:[%s5 + $0x20] sm:$0xff]
    %v534 = vld [vmem:[%s5 + $0x28] sm:$0xff]
    %v535 = vld [vmem:[%s5 + $0x30] sm:$0xff]
    %v536 = vld [vmem:[%s5 + $0x38] sm:$0xff]
    %537 = vxpose.xlu0.b32.start [1/16] %v529, 128
    %538 = vxpose.xlu0.b32.cont [2/16] %v530, 128
    %539 = vxpose.xlu0.b32.cont [3/16] %v531, 128
    %540 = vxpose.xlu0.b32.cont [4/16] %v532, 128
    %541 = vxpose.xlu0.b32.cont [5/16] %v533, 128
    %542 = vxpose.xlu0.b32.cont [6/16] %v534, 128
    %543 = vxpose.xlu0.b32.cont [7/16] %v535, 128
    %544 = vxpose.xlu0.b32.cont [8/16] %v536, 128
    %545 = vxpose.xlu0.b32.cont [9/16] 0.0, 128
    %546 = vxpose.xlu0.b32.cont [10/16] 0.0, 128
    %547 = vxpose.xlu0.b32.cont [11/16] 0.0, 128
    %548 = vxpose.xlu0.b32.cont [12/16] 0.0, 128
    %549 = vxpose.xlu0.b32.cont [13/16] 0.0, 128
    %550 = vxpose.xlu0.b32.cont [14/16] 0.0, 128
    %551 = vxpose.xlu0.b32.cont [15/16] 0.0, 128
    %552 = vxpose.xlu0.b32.end [16/16] 0.0, 128
    %v553 = vpop.trf.xlu0
    %v554 = vpop.trf.xlu0
    %v555 = vpop.trf.xlu0
    %v556 = vpop.trf.xlu0
    %v557 = vpop.trf.xlu0
    %v558 = vpop.trf.xlu0
    %v559 = vpop.trf.xlu0
    %v560 = vpop.trf.xlu0
    %v561 = vpop.trf.xlu0
    %v562 = vpop.trf.xlu0
    %v563 = vpop.trf.xlu0
    %v564 = vpop.trf.xlu0
    %v565 = vpop.trf.xlu0
    %v566 = vpop.trf.xlu0
    %v567 = vpop.trf.xlu0
    %v568 = vpop.trf.xlu0
    %v569 = vmul.f32 %v553, 0.9
    %v570 = vmul.f32 %v554, 0.9
    %v571 = vmul.f32 %v555, 0.9
    %v572 = vmul.f32 %v556, 0.9
    %v573 = vmul.f32 %v557, 0.9
    %v574 = vmul.f32 %v558, 0.9
    %v575 = vmul.f32 %v559, 0.9
    %v576 = vmul.f32 %v560, 0.9
    %v577 = vmul.f32 %v481, 0.1
    %v578 = vmul.f32 %v513, 0.1
    %vm579 = vcmask 523264
    %v581 = vsel %vm579, %v481, 0
    %v584 = vsel %vm579, %v513, 0
    %586 = vmatprep.subr.mxu0 0.0
    %587 = vmatpush1.msra.mxu0 0.0
    %588 = vmatprep.subr.mxu0 0.0
    %589 = vmatpush1.msra.mxu0 0.0
    %590 = vmatprep.subr.mxu0 0.0
    %591 = vmatpush1.msra.mxu0 0.0
    %592 = vmatprep.subr.mxu0 0.0
    %593 = vmatpush1.msra.mxu0 0.0
    %594 = vmatprep.subr.mxu0 0.0
    %595 = vmatpush1.msra.mxu0 0.0
    %596 = vmatprep.subr.mxu0 0.0
    %597 = vmatpush1.msra.mxu0 0.0
    %598 = vmatprep.subr.mxu0 0.0
    %599 = vmatpush1.msra.mxu0 0.0
    %600 = vmatprep.subr.mxu0 0.0
    %601 = vmatpush1.msra.mxu0 0.0
    %602 = vmatprep.subr.mxu0 0.0
    %603 = vmatpush1.msra.mxu0 %v576
    %604 = vmatprep.subr.mxu0 0.0
    %605 = vmatpush1.msra.mxu0 %v575
    %606 = vmatprep.subr.mxu0 0.0
    %607 = vmatpush1.msra.mxu0 %v574
    %608 = vmatprep.subr.mxu0 0.0
    %609 = vmatpush1.msra.mxu0 %v573
    %610 = vmatprep.subr.mxu0 0.0
    %611 = vmatpush1.msra.mxu0 %v572
    %612 = vmatprep.subr.mxu0 0.0
    %613 = vmatpush1.msra.mxu0 %v571
    %614 = vmatprep.subr.mxu0 0.0
    %615 = vmatpush1.msra.mxu0 %v570
    %616 = vmatprep.subr.mxu0 0.0
    %617 = vmatpush1.msra.mxu0 %v569
    %618 = vmatprep.subr.mxu0 0.0
    %619 = vmatpush2.msra.mxu0 0.0
    %620 = vmatprep.subr.mxu0 0.0
    %621 = vmatpush2.msra.mxu0 0.0
    %622 = vmatprep.subr.mxu0 0.0
    %623 = vmatpush2.msra.mxu0 0.0
    %624 = vmatprep.subr.mxu0 0.0
    %625 = vmatpush2.msra.mxu0 0.0
    %626 = vmatprep.subr.mxu0 0.0
    %627 = vmatpush2.msra.mxu0 0.0
    %628 = vmatprep.subr.mxu0 0.0
    %629 = vmatpush2.msra.mxu0 0.0
    %630 = vmatprep.subr.mxu0 0.0
    %631 = vmatpush2.msra.mxu0 0.0
    %632 = vmatprep.subr.mxu0 0.0
    %633 = vmatpush2.msra.mxu0 0.0
    %634 = vmatprep.subr.mxu0 0.0
    %635 = vmatpush2.msra.mxu0 0.0
    %636 = vmatprep.subr.mxu0 0.0
    %637 = vmatpush2.msra.mxu0 0.0
    %638 = vmatprep.subr.mxu0 0.0
    %639 = vmatpush2.msra.mxu0 0.0
    %640 = vmatprep.subr.mxu0 0.0
    %641 = vmatpush2.msra.mxu0 0.0
    %642 = vmatprep.subr.mxu0 0.0
    %643 = vmatpush2.msra.mxu0 0.0
    %644 = vmatprep.subr.mxu0 0.0
    %645 = vmatpush2.msra.mxu0 0.0
    %646 = vmatprep.subr.mxu0 0.0
    %647 = vmatpush2.msra.mxu0 0.0
    %648 = vmatprep.subr.mxu0 0.0
    %649 = vmatpush2.msra.mxu0 0.0
    %650 = vmatprep.mubr.f32.mxu0 0.0
    %651 = vmatmul.mubr.f32.gmra.mxu0 %v581
    %v652 = vpop.f32.mrf.mxu0
    %v653 = vadd.f32 %v577, %v652
    %v654 = vpop.f32.mrf.mxu0
    %655 = vmatprep.mubr.f32.mxu0 0.0
    %656 = vmatmul.mubr.f32.gmra.mxu0 %v584
    %v657 = vpop.f32.mrf.mxu0
    %v658 = vadd.f32 %v578, %v657
    %v659 = vpop.f32.mrf.mxu0
    %660 = vdwg.mxu0
    %v662 = vsel %vm579, %v653, 0
    %v665 = vsel %vm579, %v658, 0
    %667 = vmatprep.subr.mxu0 0.0
    %668 = vmatpush1.msra.mxu0 0.0
    %669 = vmatprep.subr.mxu0 0.0
    %670 = vmatpush1.msra.mxu0 0.0
    %671 = vmatprep.subr.mxu0 0.0
    %672 = vmatpush1.msra.mxu0 0.0
    %673 = vmatprep.subr.mxu0 0.0
    %674 = vmatpush1.msra.mxu0 0.0
    %675 = vmatprep.subr.mxu0 0.0
    %676 = vmatpush1.msra.mxu0 0.0
    %677 = vmatprep.subr.mxu0 0.0
    %678 = vmatpush1.msra.mxu0 0.0
    %679 = vmatprep.subr.mxu0 0.0
    %680 = vmatpush1.msra.mxu0 0.0
    %681 = vmatprep.subr.mxu0 0.0
    %682 = vmatpush1.msra.mxu0 0.0
    %683 = vmatprep.subr.mxu0 0.0
    %684 = vmatpush1.msra.mxu0 %v576
    %685 = vmatprep.subr.mxu0 0.0
    %686 = vmatpush1.msra.mxu0 %v575
    %687 = vmatprep.subr.mxu0 0.0
    %688 = vmatpush1.msra.mxu0 %v574
    %689 = vmatprep.subr.mxu0 0.0
    %690 = vmatpush1.msra.mxu0 %v573
    %691 = vmatprep.subr.mxu0 0.0
    %692 = vmatpush1.msra.mxu0 %v572
    %693 = vmatprep.subr.mxu0 0.0
    %694 = vmatpush1.msra.mxu0 %v571
    %695 = vmatprep.subr.mxu0 0.0
    %696 = vmatpush1.msra.mxu0 %v570
    %697 = vmatprep.subr.mxu0 0.0
    %698 = vmatpush1.msra.mxu0 %v569
    %699 = vmatprep.subr.mxu0 0.0
    %700 = vmatpush2.msra.mxu0 0.0
    %701 = vmatprep.subr.mxu0 0.0
    %702 = vmatpush2.msra.mxu0 0.0
    %703 = vmatprep.subr.mxu0 0.0
    %704 = vmatpush2.msra.mxu0 0.0
    %705 = vmatprep.subr.mxu0 0.0
    %706 = vmatpush2.msra.mxu0 0.0
    %707 = vmatprep.subr.mxu0 0.0
    %708 = vmatpush2.msra.mxu0 0.0
    %709 = vmatprep.subr.mxu0 0.0
    %710 = vmatpush2.msra.mxu0 0.0
    %711 = vmatprep.subr.mxu0 0.0
    %712 = vmatpush2.msra.mxu0 0.0
    %713 = vmatprep.subr.mxu0 0.0
    %714 = vmatpush2.msra.mxu0 0.0
    %715 = vmatprep.subr.mxu0 0.0
    %716 = vmatpush2.msra.mxu0 0.0
    %717 = vmatprep.subr.mxu0 0.0
    %718 = vmatpush2.msra.mxu0 0.0
    %719 = vmatprep.subr.mxu0 0.0
    %720 = vmatpush2.msra.mxu0 0.0
    %721 = vmatprep.subr.mxu0 0.0
    %722 = vmatpush2.msra.mxu0 0.0
    %723 = vmatprep.subr.mxu0 0.0
    %724 = vmatpush2.msra.mxu0 0.0
    %725 = vmatprep.subr.mxu0 0.0
    %726 = vmatpush2.msra.mxu0 0.0
    %727 = vmatprep.subr.mxu0 0.0
    %728 = vmatpush2.msra.mxu0 0.0
    %729 = vmatprep.subr.mxu0 0.0
    %730 = vmatpush2.msra.mxu0 0.0
    %731 = vmatprep.mubr.f32.mxu0 0.0
    %732 = vmatmul.mubr.f32.gmra.mxu0 %v662
    %v733 = vpop.f32.mrf.mxu0
    %v734 = vadd.f32 %v577, %v733
    %v735 = vpop.f32.mrf.mxu0
    %736 = vmatprep.mubr.f32.mxu0 0.0
    %737 = vmatmul.mubr.f32.gmra.mxu0 %v665
    %v738 = vpop.f32.mrf.mxu0
    %v739 = vadd.f32 %v578, %v738
    %v740 = vpop.f32.mrf.mxu0
    %741 = vdwg.mxu0
    %v743 = vsel %vm579, %v734, 0
    %v746 = vsel %vm579, %v739, 0
    %748 = vmatprep.subr.mxu0 0.0
    %749 = vmatpush1.msra.mxu0 0.0
    %750 = vmatprep.subr.mxu0 0.0
    %751 = vmatpush1.msra.mxu0 0.0
    %752 = vmatprep.subr.mxu0 0.0
    %753 = vmatpush1.msra.mxu0 0.0
    %754 = vmatprep.subr.mxu0 0.0
    %755 = vmatpush1.msra.mxu0 0.0
    %756 = vmatprep.subr.mxu0 0.0
    %757 = vmatpush1.msra.mxu0 0.0
    %758 = vmatprep.subr.mxu0 0.0
    %759 = vmatpush1.msra.mxu0 0.0
    %760 = vmatprep.subr.mxu0 0.0
    %761 = vmatpush1.msra.mxu0 0.0
    %762 = vmatprep.subr.mxu0 0.0
    %763 = vmatpush1.msra.mxu0 0.0
    %764 = vmatprep.subr.mxu0 0.0
    %765 = vmatpush1.msra.mxu0 %v576
    %766 = vmatprep.subr.mxu0 0.0
    %767 = vmatpush1.msra.mxu0 %v575
    %768 = vmatprep.subr.mxu0 0.0
    %769 = vmatpush1.msra.mxu0 %v574
    %770 = vmatprep.subr.mxu0 0.0
    %771 = vmatpush1.msra.mxu0 %v573
    %772 = vmatprep.subr.mxu0 0.0
    %773 = vmatpush1.msra.mxu0 %v572
    %774 = vmatprep.subr.mxu0 0.0
    %775 = vmatpush1.msra.mxu0 %v571
    %776 = vmatprep.subr.mxu0 0.0
    %777 = vmatpush1.msra.mxu0 %v570
    %778 = vmatprep.subr.mxu0 0.0
    %779 = vmatpush1.msra.mxu0 %v569
    %780 = vmatprep.subr.mxu0 0.0
    %781 = vmatpush2.msra.mxu0 0.0
    %782 = vmatprep.subr.mxu0 0.0
    %783 = vmatpush2.msra.mxu0 0.0
    %784 = vmatprep.subr.mxu0 0.0
    %785 = vmatpush2.msra.mxu0 0.0
    %786 = vmatprep.subr.mxu0 0.0
    %787 = vmatpush2.msra.mxu0 0.0
    %788 = vmatprep.subr.mxu0 0.0
    %789 = vmatpush2.msra.mxu0 0.0
    %790 = vmatprep.subr.mxu0 0.0
    %791 = vmatpush2.msra.mxu0 0.0
    %792 = vmatprep.subr.mxu0 0.0
    %793 = vmatpush2.msra.mxu0 0.0
    %794 = vmatprep.subr.mxu0 0.0
    %795 = vmatpush2.msra.mxu0 0.0
    %796 = vmatprep.subr.mxu0 0.0
    %797 = vmatpush2.msra.mxu0 0.0
    %798 = vmatprep.subr.mxu0 0.0
    %799 = vmatpush2.msra.mxu0 0.0
    %800 = vmatprep.subr.mxu0 0.0
    %801 = vmatpush2.msra.mxu0 0.0
    %802 = vmatprep.subr.mxu0 0.0
    %803 = vmatpush2.msra.mxu0 0.0
    %804 = vmatprep.subr.mxu0 0.0
    %805 = vmatpush2.msra.mxu0 0.0
    %806 = vmatprep.subr.mxu0 0.0
    %807 = vmatpush2.msra.mxu0 0.0
    %808 = vmatprep.subr.mxu0 0.0
    %809 = vmatpush2.msra.mxu0 0.0
    %810 = vmatprep.subr.mxu0 0.0
    %811 = vmatpush2.msra.mxu0 0.0
    %812 = vmatprep.mubr.f32.mxu0 0.0
    %813 = vmatmul.mubr.f32.gmra.mxu0 %v743
    %v814 = vpop.f32.mrf.mxu0
    %v815 = vadd.f32 %v577, %v814
    %v816 = vpop.f32.mrf.mxu0
    %817 = vmatprep.mubr.f32.mxu0 0.0
    %818 = vmatmul.mubr.f32.gmra.mxu0 %v746
    %v819 = vpop.f32.mrf.mxu0
    %v820 = vadd.f32 %v578, %v819
    %v821 = vpop.f32.mrf.mxu0
    %822 = vdwg.mxu0
    %v824 = vsel %vm579, %v815, 0
    %v827 = vsel %vm579, %v820, 0
    %829 = vmatprep.subr.mxu0 0.0
    %830 = vmatpush1.msra.mxu0 0.0
    %831 = vmatprep.subr.mxu0 0.0
    %832 = vmatpush1.msra.mxu0 0.0
    %833 = vmatprep.subr.mxu0 0.0
    %834 = vmatpush1.msra.mxu0 0.0
    %835 = vmatprep.subr.mxu0 0.0
    %836 = vmatpush1.msra.mxu0 0.0
    %837 = vmatprep.subr.mxu0 0.0
    %838 = vmatpush1.msra.mxu0 0.0
    %839 = vmatprep.subr.mxu0 0.0
    %840 = vmatpush1.msra.mxu0 0.0
    %841 = vmatprep.subr.mxu0 0.0
    %842 = vmatpush1.msra.mxu0 0.0
    %843 = vmatprep.subr.mxu0 0.0
    %844 = vmatpush1.msra.mxu0 0.0
    %845 = vmatprep.subr.mxu0 0.0
    %846 = vmatpush1.msra.mxu0 %v576
    %847 = vmatprep.subr.mxu0 0.0
    %848 = vmatpush1.msra.mxu0 %v575
    %849 = vmatprep.subr.mxu0 0.0
    %850 = vmatpush1.msra.mxu0 %v574
    %851 = vmatprep.subr.mxu0 0.0
    %852 = vmatpush1.msra.mxu0 %v573
    %853 = vmatprep.subr.mxu0 0.0
    %854 = vmatpush1.msra.mxu0 %v572
    %855 = vmatprep.subr.mxu0 0.0
    %856 = vmatpush1.msra.mxu0 %v571
    %857 = vmatprep.subr.mxu0 0.0
    %858 = vmatpush1.msra.mxu0 %v570
    %859 = vmatprep.subr.mxu0 0.0
    %860 = vmatpush1.msra.mxu0 %v569
    %861 = vmatprep.subr.mxu0 0.0
    %862 = vmatpush2.msra.mxu0 0.0
    %863 = vmatprep.subr.mxu0 0.0
    %864 = vmatpush2.msra.mxu0 0.0
    %865 = vmatprep.subr.mxu0 0.0
    %866 = vmatpush2.msra.mxu0 0.0
    %867 = vmatprep.subr.mxu0 0.0
    %868 = vmatpush2.msra.mxu0 0.0
    %869 = vmatprep.subr.mxu0 0.0
    %870 = vmatpush2.msra.mxu0 0.0
    %871 = vmatprep.subr.mxu0 0.0
    %872 = vmatpush2.msra.mxu0 0.0
    %873 = vmatprep.subr.mxu0 0.0
    %874 = vmatpush2.msra.mxu0 0.0
    %875 = vmatprep.subr.mxu0 0.0
    %876 = vmatpush2.msra.mxu0 0.0
    %877 = vmatprep.subr.mxu0 0.0
    %878 = vmatpush2.msra.mxu0 0.0
    %879 = vmatprep.subr.mxu0 0.0
    %880 = vmatpush2.msra.mxu0 0.0
    %881 = vmatprep.subr.mxu0 0.0
    %882 = vmatpush2.msra.mxu0 0.0
    %883 = vmatprep.subr.mxu0 0.0
    %884 = vmatpush2.msra.mxu0 0.0
    %885 = vmatprep.subr.mxu0 0.0
    %886 = vmatpush2.msra.mxu0 0.0
    %887 = vmatprep.subr.mxu0 0.0
    %888 = vmatpush2.msra.mxu0 0.0
    %889 = vmatprep.subr.mxu0 0.0
    %890 = vmatpush2.msra.mxu0 0.0
    %891 = vmatprep.subr.mxu0 0.0
    %892 = vmatpush2.msra.mxu0 0.0
    %893 = vmatprep.mubr.f32.mxu0 0.0
    %894 = vmatmul.mubr.f32.gmra.mxu0 %v824
    %v895 = vpop.f32.mrf.mxu0
    %v896 = vadd.f32 %v577, %v895
    %v897 = vpop.f32.mrf.mxu0
    %898 = vmatprep.mubr.f32.mxu0 0.0
    %899 = vmatmul.mubr.f32.gmra.mxu0 %v827
    %v900 = vpop.f32.mrf.mxu0
    %v901 = vadd.f32 %v578, %v900
    %v902 = vpop.f32.mrf.mxu0
    %903 = vdwg.mxu0
    %v905 = vsel %vm579, %v896, 0
    %v908 = vsel %vm579, %v901, 0
    %910 = vmatprep.subr.mxu0 0.0
    %911 = vmatpush1.msra.mxu0 0.0
    %912 = vmatprep.subr.mxu0 0.0
    %913 = vmatpush1.msra.mxu0 0.0
    %914 = vmatprep.subr.mxu0 0.0
    %915 = vmatpush1.msra.mxu0 0.0
    %916 = vmatprep.subr.mxu0 0.0
    %917 = vmatpush1.msra.mxu0 0.0
    %918 = vmatprep.subr.mxu0 0.0
    %919 = vmatpush1.msra.mxu0 0.0
    %920 = vmatprep.subr.mxu0 0.0
    %921 = vmatpush1.msra.mxu0 0.0
    %922 = vmatprep.subr.mxu0 0.0
    %923 = vmatpush1.msra.mxu0 0.0
    %924 = vmatprep.subr.mxu0 0.0
    %925 = vmatpush1.msra.mxu0 0.0
    %926 = vmatprep.subr.mxu0 0.0
    %927 = vmatpush1.msra.mxu0 %v576
    %928 = vmatprep.subr.mxu0 0.0
    %929 = vmatpush1.msra.mxu0 %v575
    %930 = vmatprep.subr.mxu0 0.0
    %931 = vmatpush1.msra.mxu0 %v574
    %932 = vmatprep.subr.mxu0 0.0
    %933 = vmatpush1.msra.mxu0 %v573
    %934 = vmatprep.subr.mxu0 0.0
    %935 = vmatpush1.msra.mxu0 %v572
    %936 = vmatprep.subr.mxu0 0.0
    %937 = vmatpush1.msra.mxu0 %v571
    %938 = vmatprep.subr.mxu0 0.0
    %939 = vmatpush1.msra.mxu0 %v570
    %940 = vmatprep.subr.mxu0 0.0
    %941 = vmatpush1.msra.mxu0 %v569
    %942 = vmatprep.subr.mxu0 0.0
    %943 = vmatpush2.msra.mxu0 0.0
    %944 = vmatprep.subr.mxu0 0.0
    %945 = vmatpush2.msra.mxu0 0.0
    %946 = vmatprep.subr.mxu0 0.0
    %947 = vmatpush2.msra.mxu0 0.0
    %948 = vmatprep.subr.mxu0 0.0
    %949 = vmatpush2.msra.mxu0 0.0
    %950 = vmatprep.subr.mxu0 0.0
    %951 = vmatpush2.msra.mxu0 0.0
    %952 = vmatprep.subr.mxu0 0.0
    %953 = vmatpush2.msra.mxu0 0.0
    %954 = vmatprep.subr.mxu0 0.0
    %955 = vmatpush2.msra.mxu0 0.0
    %956 = vmatprep.subr.mxu0 0.0
    %957 = vmatpush2.msra.mxu0 0.0
    %958 = vmatprep.subr.mxu0 0.0
    %959 = vmatpush2.msra.mxu0 0.0
    %960 = vmatprep.subr.mxu0 0.0
    %961 = vmatpush2.msra.mxu0 0.0
    %962 = vmatprep.subr.mxu0 0.0
    %963 = vmatpush2.msra.mxu0 0.0
    %964 = vmatprep.subr.mxu0 0.0
    %965 = vmatpush2.msra.mxu0 0.0
    %966 = vmatprep.subr.mxu0 0.0
    %967 = vmatpush2.msra.mxu0 0.0
    %968 = vmatprep.subr.mxu0 0.0
    %969 = vmatpush2.msra.mxu0 0.0
    %970 = vmatprep.subr.mxu0 0.0
    %971 = vmatpush2.msra.mxu0 0.0
    %972 = vmatprep.subr.mxu0 0.0
    %973 = vmatpush2.msra.mxu0 0.0
    %974 = vmatprep.mubr.f32.mxu0 0.0
    %975 = vmatmul.mubr.f32.gmra.mxu0 %v905
    %v976 = vpop.f32.mrf.mxu0
    %v977 = vadd.f32 %v577, %v976
    %v978 = vpop.f32.mrf.mxu0
    %979 = vmatprep.mubr.f32.mxu0 0.0
    %980 = vmatmul.mubr.f32.gmra.mxu0 %v908
    %v981 = vpop.f32.mrf.mxu0
    %v982 = vadd.f32 %v578, %v981
    %v983 = vpop.f32.mrf.mxu0
    %984 = vdwg.mxu0
    %v986 = vsel %vm579, %v977, 0
    %v989 = vsel %vm579, %v982, 0
    %991 = vmatprep.subr.mxu0 0.0
    %992 = vmatpush1.msra.mxu0 0.0
    %993 = vmatprep.subr.mxu0 0.0
    %994 = vmatpush1.msra.mxu0 0.0
    %995 = vmatprep.subr.mxu0 0.0
    %996 = vmatpush1.msra.mxu0 0.0
    %997 = vmatprep.subr.mxu0 0.0
    %998 = vmatpush1.msra.mxu0 0.0
    %999 = vmatprep.subr.mxu0 0.0
    %1000 = vmatpush1.msra.mxu0 0.0
    %1001 = vmatprep.subr.mxu0 0.0
    %1002 = vmatpush1.msra.mxu0 0.0
    %1003 = vmatprep.subr.mxu0 0.0
    %1004 = vmatpush1.msra.mxu0 0.0
    %1005 = vmatprep.subr.mxu0 0.0
    %1006 = vmatpush1.msra.mxu0 0.0
    %1007 = vmatprep.subr.mxu0 0.0
    %1008 = vmatpush1.msra.mxu0 %v576
    %1009 = vmatprep.subr.mxu0 0.0
    %1010 = vmatpush1.msra.mxu0 %v575
    %1011 = vmatprep.subr.mxu0 0.0
    %1012 = vmatpush1.msra.mxu0 %v574
    %1013 = vmatprep.subr.mxu0 0.0
    %1014 = vmatpush1.msra.mxu0 %v573
    %1015 = vmatprep.subr.mxu0 0.0
    %1016 = vmatpush1.msra.mxu0 %v572
    %1017 = vmatprep.subr.mxu0 0.0
    %1018 = vmatpush1.msra.mxu0 %v571
    %1019 = vmatprep.subr.mxu0 0.0
    %1020 = vmatpush1.msra.mxu0 %v570
    %1021 = vmatprep.subr.mxu0 0.0
    %1022 = vmatpush1.msra.mxu0 %v569
    %1023 = vmatprep.subr.mxu0 0.0
    %1024 = vmatpush2.msra.mxu0 0.0
    %1025 = vmatprep.subr.mxu0 0.0
    %1026 = vmatpush2.msra.mxu0 0.0
    %1027 = vmatprep.subr.mxu0 0.0
    %1028 = vmatpush2.msra.mxu0 0.0
    %1029 = vmatprep.subr.mxu0 0.0
    %1030 = vmatpush2.msra.mxu0 0.0
    %1031 = vmatprep.subr.mxu0 0.0
    %1032 = vmatpush2.msra.mxu0 0.0
    %1033 = vmatprep.subr.mxu0 0.0
    %1034 = vmatpush2.msra.mxu0 0.0
    %1035 = vmatprep.subr.mxu0 0.0
    %1036 = vmatpush2.msra.mxu0 0.0
    %1037 = vmatprep.subr.mxu0 0.0
    %1038 = vmatpush2.msra.mxu0 0.0
    %1039 = vmatprep.subr.mxu0 0.0
    %1040 = vmatpush2.msra.mxu0 0.0
    %1041 = vmatprep.subr.mxu0 0.0
    %1042 = vmatpush2.msra.mxu0 0.0
    %1043 = vmatprep.subr.mxu0 0.0
    %1044 = vmatpush2.msra.mxu0 0.0
    %1045 = vmatprep.subr.mxu0 0.0
    %1046 = vmatpush2.msra.mxu0 0.0
    %1047 = vmatprep.subr.mxu0 0.0
    %1048 = vmatpush2.msra.mxu0 0.0
    %1049 = vmatprep.subr.mxu0 0.0
    %1050 = vmatpush2.msra.mxu0 0.0
    %1051 = vmatprep.subr.mxu0 0.0
    %1052 = vmatpush2.msra.mxu0 0.0
    %1053 = vmatprep.subr.mxu0 0.0
    %1054 = vmatpush2.msra.mxu0 0.0
    %1055 = vmatprep.mubr.f32.mxu0 0.0
    %1056 = vmatmul.mubr.f32.gmra.mxu0 %v986
    %v1057 = vpop.f32.mrf.mxu0
    %v1058 = vadd.f32 %v577, %v1057
    %v1059 = vpop.f32.mrf.mxu0
    %1060 = vmatprep.mubr.f32.mxu0 0.0
    %1061 = vmatmul.mubr.f32.gmra.mxu0 %v989
    %v1062 = vpop.f32.mrf.mxu0
    %v1063 = vadd.f32 %v578, %v1062
    %v1064 = vpop.f32.mrf.mxu0
    %1065 = vdwg.mxu0
    %v1067 = vsel %vm579, %v1058, 0
    %v1070 = vsel %vm579, %v1063, 0
    %1072 = vmatprep.subr.mxu0 0.0
    %1073 = vmatpush1.msra.mxu0 0.0
    %1074 = vmatprep.subr.mxu0 0.0
    %1075 = vmatpush1.msra.mxu0 0.0
    %1076 = vmatprep.subr.mxu0 0.0
    %1077 = vmatpush1.msra.mxu0 0.0
    %1078 = vmatprep.subr.mxu0 0.0
    %1079 = vmatpush1.msra.mxu0 0.0
    %1080 = vmatprep.subr.mxu0 0.0
    %1081 = vmatpush1.msra.mxu0 0.0
    %1082 = vmatprep.subr.mxu0 0.0
    %1083 = vmatpush1.msra.mxu0 0.0
    %1084 = vmatprep.subr.mxu0 0.0
    %1085 = vmatpush1.msra.mxu0 0.0
    %1086 = vmatprep.subr.mxu0 0.0
    %1087 = vmatpush1.msra.mxu0 0.0
    %1088 = vmatprep.subr.mxu0 0.0
    %1089 = vmatpush1.msra.mxu0 %v576
    %1090 = vmatprep.subr.mxu0 0.0
    %1091 = vmatpush1.msra.mxu0 %v575
    %1092 = vmatprep.subr.mxu0 0.0
    %1093 = vmatpush1.msra.mxu0 %v574
    %1094 = vmatprep.subr.mxu0 0.0
    %1095 = vmatpush1.msra.mxu0 %v573
    %1096 = vmatprep.subr.mxu0 0.0
    %1097 = vmatpush1.msra.mxu0 %v572
    %1098 = vmatprep.subr.mxu0 0.0
    %1099 = vmatpush1.msra.mxu0 %v571
    %1100 = vmatprep.subr.mxu0 0.0
    %1101 = vmatpush1.msra.mxu0 %v570
    %1102 = vmatprep.subr.mxu0 0.0
    %1103 = vmatpush1.msra.mxu0 %v569
    %1104 = vmatprep.subr.mxu0 0.0
    %1105 = vmatpush2.msra.mxu0 0.0
    %1106 = vmatprep.subr.mxu0 0.0
    %1107 = vmatpush2.msra.mxu0 0.0
    %1108 = vmatprep.subr.mxu0 0.0
    %1109 = vmatpush2.msra.mxu0 0.0
    %1110 = vmatprep.subr.mxu0 0.0
    %1111 = vmatpush2.msra.mxu0 0.0
    %1112 = vmatprep.subr.mxu0 0.0
    %1113 = vmatpush2.msra.mxu0 0.0
    %1114 = vmatprep.subr.mxu0 0.0
    %1115 = vmatpush2.msra.mxu0 0.0
    %1116 = vmatprep.subr.mxu0 0.0
    %1117 = vmatpush2.msra.mxu0 0.0
    %1118 = vmatprep.subr.mxu0 0.0
    %1119 = vmatpush2.msra.mxu0 0.0
    %1120 = vmatprep.subr.mxu0 0.0
    %1121 = vmatpush2.msra.mxu0 0.0
    %1122 = vmatprep.subr.mxu0 0.0
    %1123 = vmatpush2.msra.mxu0 0.0
    %1124 = vmatprep.subr.mxu0 0.0
    %1125 = vmatpush2.msra.mxu0 0.0
    %1126 = vmatprep.subr.mxu0 0.0
    %1127 = vmatpush2.msra.mxu0 0.0
    %1128 = vmatprep.subr.mxu0 0.0
    %1129 = vmatpush2.msra.mxu0 0.0
    %1130 = vmatprep.subr.mxu0 0.0
    %1131 = vmatpush2.msra.mxu0 0.0
    %1132 = vmatprep.subr.mxu0 0.0
    %1133 = vmatpush2.msra.mxu0 0.0
    %1134 = vmatprep.subr.mxu0 0.0
    %1135 = vmatpush2.msra.mxu0 0.0
    %1136 = vmatprep.mubr.f32.mxu0 0.0
    %1137 = vmatmul.mubr.f32.gmra.mxu0 %v1067
    %v1138 = vpop.f32.mrf.mxu0
    %v1139 = vadd.f32 %v577, %v1138
    %v1140 = vpop.f32.mrf.mxu0
    %1141 = vmatprep.mubr.f32.mxu0 0.0
    %1142 = vmatmul.mubr.f32.gmra.mxu0 %v1070
    %v1143 = vpop.f32.mrf.mxu0
    %v1144 = vadd.f32 %v578, %v1143
    %v1145 = vpop.f32.mrf.mxu0
    %1146 = vdwg.mxu0
    %v1148 = vsel %vm579, %v1139, 0
    %v1151 = vsel %vm579, %v1144, 0
    %1153 = vmatprep.subr.mxu0 0.0
    %1154 = vmatpush1.msra.mxu0 0.0
    %1155 = vmatprep.subr.mxu0 0.0
    %1156 = vmatpush1.msra.mxu0 0.0
    %1157 = vmatprep.subr.mxu0 0.0
    %1158 = vmatpush1.msra.mxu0 0.0
    %1159 = vmatprep.subr.mxu0 0.0
    %1160 = vmatpush1.msra.mxu0 0.0
    %1161 = vmatprep.subr.mxu0 0.0
    %1162 = vmatpush1.msra.mxu0 0.0
    %1163 = vmatprep.subr.mxu0 0.0
    %1164 = vmatpush1.msra.mxu0 0.0
    %1165 = vmatprep.subr.mxu0 0.0
    %1166 = vmatpush1.msra.mxu0 0.0
    %1167 = vmatprep.subr.mxu0 0.0
    %1168 = vmatpush1.msra.mxu0 0.0
    %1169 = vmatprep.subr.mxu0 0.0
    %1170 = vmatpush1.msra.mxu0 %v576
    %1171 = vmatprep.subr.mxu0 0.0
    %1172 = vmatpush1.msra.mxu0 %v575
    %1173 = vmatprep.subr.mxu0 0.0
    %1174 = vmatpush1.msra.mxu0 %v574
    %1175 = vmatprep.subr.mxu0 0.0
    %1176 = vmatpush1.msra.mxu0 %v573
    %1177 = vmatprep.subr.mxu0 0.0
    %1178 = vmatpush1.msra.mxu0 %v572
    %1179 = vmatprep.subr.mxu0 0.0
    %1180 = vmatpush1.msra.mxu0 %v571
    %1181 = vmatprep.subr.mxu0 0.0
    %1182 = vmatpush1.msra.mxu0 %v570
    %1183 = vmatprep.subr.mxu0 0.0
    %1184 = vmatpush1.msra.mxu0 %v569
    %1185 = vmatprep.subr.mxu0 0.0
    %1186 = vmatpush2.msra.mxu0 0.0
    %1187 = vmatprep.subr.mxu0 0.0
    %1188 = vmatpush2.msra.mxu0 0.0
    %1189 = vmatprep.subr.mxu0 0.0
    %1190 = vmatpush2.msra.mxu0 0.0
    %1191 = vmatprep.subr.mxu0 0.0
    %1192 = vmatpush2.msra.mxu0 0.0
    %1193 = vmatprep.subr.mxu0 0.0
    %1194 = vmatpush2.msra.mxu0 0.0
    %1195 = vmatprep.subr.mxu0 0.0
    %1196 = vmatpush2.msra.mxu0 0.0
    %1197 = vmatprep.subr.mxu0 0.0
    %1198 = vmatpush2.msra.mxu0 0.0
    %1199 = vmatprep.subr.mxu0 0.0
    %1200 = vmatpush2.msra.mxu0 0.0
    %1201 = vmatprep.subr.mxu0 0.0
    %1202 = vmatpush2.msra.mxu0 0.0
    %1203 = vmatprep.subr.mxu0 0.0
    %1204 = vmatpush2.msra.mxu0 0.0
    %1205 = vmatprep.subr.mxu0 0.0
    %1206 = vmatpush2.msra.mxu0 0.0
    %1207 = vmatprep.subr.mxu0 0.0
    %1208 = vmatpush2.msra.mxu0 0.0
    %1209 = vmatprep.subr.mxu0 0.0
    %1210 = vmatpush2.msra.mxu0 0.0
    %1211 = vmatprep.subr.mxu0 0.0
    %1212 = vmatpush2.msra.mxu0 0.0
    %1213 = vmatprep.subr.mxu0 0.0
    %1214 = vmatpush2.msra.mxu0 0.0
    %1215 = vmatprep.subr.mxu0 0.0
    %1216 = vmatpush2.msra.mxu0 0.0
    %1217 = vmatprep.mubr.f32.mxu0 0.0
    %1218 = vmatmul.mubr.f32.gmra.mxu0 %v1148
    %v1219 = vpop.f32.mrf.mxu0
    %v1220 = vadd.f32 %v577, %v1219
    %v1221 = vpop.f32.mrf.mxu0
    %1222 = vmatprep.mubr.f32.mxu0 0.0
    %1223 = vmatmul.mubr.f32.gmra.mxu0 %v1151
    %v1224 = vpop.f32.mrf.mxu0
    %v1225 = vadd.f32 %v578, %v1224
    %v1226 = vpop.f32.mrf.mxu0
    %1227 = vdwg.mxu0
    %v1229 = vsel %vm579, %v1220, 0
    %v1232 = vsel %vm579, %v1225, 0
    %1234 = vmatprep.subr.mxu0 0.0
    %1235 = vmatpush1.msra.mxu0 0.0
    %1236 = vmatprep.subr.mxu0 0.0
    %1237 = vmatpush1.msra.mxu0 0.0
    %1238 = vmatprep.subr.mxu0 0.0
    %1239 = vmatpush1.msra.mxu0 0.0
    %1240 = vmatprep.subr.mxu0 0.0
    %1241 = vmatpush1.msra.mxu0 0.0
    %1242 = vmatprep.subr.mxu0 0.0
    %1243 = vmatpush1.msra.mxu0 0.0
    %1244 = vmatprep.subr.mxu0 0.0
    %1245 = vmatpush1.msra.mxu0 0.0
    %1246 = vmatprep.subr.mxu0 0.0
    %1247 = vmatpush1.msra.mxu0 0.0
    %1248 = vmatprep.subr.mxu0 0.0
    %1249 = vmatpush1.msra.mxu0 0.0
    %1250 = vmatprep.subr.mxu0 0.0
    %1251 = vmatpush1.msra.mxu0 %v576
    %1252 = vmatprep.subr.mxu0 0.0
    %1253 = vmatpush1.msra.mxu0 %v575
    %1254 = vmatprep.subr.mxu0 0.0
    %1255 = vmatpush1.msra.mxu0 %v574
    %1256 = vmatprep.subr.mxu0 0.0
    %1257 = vmatpush1.msra.mxu0 %v573
    %1258 = vmatprep.subr.mxu0 0.0
    %1259 = vmatpush1.msra.mxu0 %v572
    %1260 = vmatprep.subr.mxu0 0.0
    %1261 = vmatpush1.msra.mxu0 %v571
    %1262 = vmatprep.subr.mxu0 0.0
    %1263 = vmatpush1.msra.mxu0 %v570
    %1264 = vmatprep.subr.mxu0 0.0
    %1265 = vmatpush1.msra.mxu0 %v569
    %1266 = vmatprep.subr.mxu0 0.0
    %1267 = vmatpush2.msra.mxu0 0.0
    %1268 = vmatprep.subr.mxu0 0.0
    %1269 = vmatpush2.msra.mxu0 0.0
    %1270 = vmatprep.subr.mxu0 0.0
    %1271 = vmatpush2.msra.mxu0 0.0
    %1272 = vmatprep.subr.mxu0 0.0
    %1273 = vmatpush2.msra.mxu0 0.0
    %1274 = vmatprep.subr.mxu0 0.0
    %1275 = vmatpush2.msra.mxu0 0.0
    %1276 = vmatprep.subr.mxu0 0.0
    %1277 = vmatpush2.msra.mxu0 0.0
    %1278 = vmatprep.subr.mxu0 0.0
    %1279 = vmatpush2.msra.mxu0 0.0
    %1280 = vmatprep.subr.mxu0 0.0
    %1281 = vmatpush2.msra.mxu0 0.0
    %1282 = vmatprep.subr.mxu0 0.0
    %1283 = vmatpush2.msra.mxu0 0.0
    %1284 = vmatprep.subr.mxu0 0.0
    %1285 = vmatpush2.msra.mxu0 0.0
    %1286 = vmatprep.subr.mxu0 0.0
    %1287 = vmatpush2.msra.mxu0 0.0
    %1288 = vmatprep.subr.mxu0 0.0
    %1289 = vmatpush2.msra.mxu0 0.0
    %1290 = vmatprep.subr.mxu0 0.0
    %1291 = vmatpush2.msra.mxu0 0.0
    %1292 = vmatprep.subr.mxu0 0.0
    %1293 = vmatpush2.msra.mxu0 0.0
    %1294 = vmatprep.subr.mxu0 0.0
    %1295 = vmatpush2.msra.mxu0 0.0
    %1296 = vmatprep.subr.mxu0 0.0
    %1297 = vmatpush2.msra.mxu0 0.0
    %1298 = vmatprep.mubr.f32.mxu0 0.0
    %1299 = vmatmul.mubr.f32.gmra.mxu0 %v1229
    %v1300 = vpop.f32.mrf.mxu0
    %v1301 = vadd.f32 %v577, %v1300
    %v1302 = vpop.f32.mrf.mxu0
    %1303 = vmatprep.mubr.f32.mxu0 0.0
    %1304 = vmatmul.mubr.f32.gmra.mxu0 %v1232
    %v1305 = vpop.f32.mrf.mxu0
    %v1306 = vadd.f32 %v578, %v1305
    %v1307 = vpop.f32.mrf.mxu0
    %1308 = vdwg.mxu0
    %v1310 = vsel %vm579, %v1301, 0
    %v1313 = vsel %vm579, %v1306, 0
    %1315 = vmatprep.subr.mxu0 0.0
    %1316 = vmatpush1.msra.mxu0 0.0
    %1317 = vmatprep.subr.mxu0 0.0
    %1318 = vmatpush1.msra.mxu0 0.0
    %1319 = vmatprep.subr.mxu0 0.0
    %1320 = vmatpush1.msra.mxu0 0.0
    %1321 = vmatprep.subr.mxu0 0.0
    %1322 = vmatpush1.msra.mxu0 0.0
    %1323 = vmatprep.subr.mxu0 0.0
    %1324 = vmatpush1.msra.mxu0 0.0
    %1325 = vmatprep.subr.mxu0 0.0
    %1326 = vmatpush1.msra.mxu0 0.0
    %1327 = vmatprep.subr.mxu0 0.0
    %1328 = vmatpush1.msra.mxu0 0.0
    %1329 = vmatprep.subr.mxu0 0.0
    %1330 = vmatpush1.msra.mxu0 0.0
    %1331 = vmatprep.subr.mxu0 0.0
    %1332 = vmatpush1.msra.mxu0 %v576
    %1333 = vmatprep.subr.mxu0 0.0
    %1334 = vmatpush1.msra.mxu0 %v575
    %1335 = vmatprep.subr.mxu0 0.0
    %1336 = vmatpush1.msra.mxu0 %v574
    %1337 = vmatprep.subr.mxu0 0.0
    %1338 = vmatpush1.msra.mxu0 %v573
    %1339 = vmatprep.subr.mxu0 0.0
    %1340 = vmatpush1.msra.mxu0 %v572
    %1341 = vmatprep.subr.mxu0 0.0
    %1342 = vmatpush1.msra.mxu0 %v571
    %1343 = vmatprep.subr.mxu0 0.0
    %1344 = vmatpush1.msra.mxu0 %v570
    %1345 = vmatprep.subr.mxu0 0.0
    %1346 = vmatpush1.msra.mxu0 %v569
    %1347 = vmatprep.subr.mxu0 0.0
    %1348 = vmatpush2.msra.mxu0 0.0
    %1349 = vmatprep.subr.mxu0 0.0
    %1350 = vmatpush2.msra.mxu0 0.0
    %1351 = vmatprep.subr.mxu0 0.0
    %1352 = vmatpush2.msra.mxu0 0.0
    %1353 = vmatprep.subr.mxu0 0.0
    %1354 = vmatpush2.msra.mxu0 0.0
    %1355 = vmatprep.subr.mxu0 0.0
    %1356 = vmatpush2.msra.mxu0 0.0
    %1357 = vmatprep.subr.mxu0 0.0
    %1358 = vmatpush2.msra.mxu0 0.0
    %1359 = vmatprep.subr.mxu0 0.0
    %1360 = vmatpush2.msra.mxu0 0.0
    %1361 = vmatprep.subr.mxu0 0.0
    %1362 = vmatpush2.msra.mxu0 0.0
    %1363 = vmatprep.subr.mxu0 0.0
    %1364 = vmatpush2.msra.mxu0 0.0
    %1365 = vmatprep.subr.mxu0 0.0
    %1366 = vmatpush2.msra.mxu0 0.0
    %1367 = vmatprep.subr.mxu0 0.0
    %1368 = vmatpush2.msra.mxu0 0.0
    %1369 = vmatprep.subr.mxu0 0.0
    %1370 = vmatpush2.msra.mxu0 0.0
    %1371 = vmatprep.subr.mxu0 0.0
    %1372 = vmatpush2.msra.mxu0 0.0
    %1373 = vmatprep.subr.mxu0 0.0
    %1374 = vmatpush2.msra.mxu0 0.0
    %1375 = vmatprep.subr.mxu0 0.0
    %1376 = vmatpush2.msra.mxu0 0.0
    %1377 = vmatprep.subr.mxu0 0.0
    %1378 = vmatpush2.msra.mxu0 0.0
    %1379 = vmatprep.mubr.f32.mxu0 0.0
    %1380 = vmatmul.mubr.f32.gmra.mxu0 %v1310
    %v1381 = vpop.f32.mrf.mxu0
    %v1382 = vadd.f32 %v577, %v1381
    %v1383 = vpop.f32.mrf.mxu0
    %1384 = vmatprep.mubr.f32.mxu0 0.0
    %1385 = vmatmul.mubr.f32.gmra.mxu0 %v1313
    %v1386 = vpop.f32.mrf.mxu0
    %v1387 = vadd.f32 %v578, %v1386
    %v1388 = vpop.f32.mrf.mxu0
    %1389 = vdwg.mxu0
    %v1390 = vsel %vm579, %v1382, -inf
    %v1391 = vrot.slane %v1390, 4
    %v1392 = vmax.f32 %v1390, %v1391
    %v1393 = vrot.slane %v1392, 2
    %v1394 = vmax.f32 %v1392, %v1393
    %v1395 = vrot.slane %v1394, 1
    %v1396 = vmax.f32 %v1394, %v1395
    %v1397 = vsub.f32 %v1382, %v1396
    %v1398 = vmul.f32 %v1397, 1.442695
    %v1399 = vpow.pop %v1398
    %v1400 = vsel %vm579, %v1399, 0.0
    %v1401 = vrot.slane %v1400, 4
    %v1402 = vadd.f32 %v1400, %v1401
    %v1403 = vrot.slane %v1402, 2
    %v1404 = vadd.f32 %v1402, %v1403
    %v1405 = vrot.slane %v1404, 1
    %v1406 = vadd.f32 %v1404, %v1405
    %v1407 = vlog2.pop %v1406
    %v1408 = vmul.f32 %v1407, 0.6931472
    %v1409 = vsub.f32 %v1397, %v1408
    %1410 = vst.msk [vmem:[#allocation2] sm:$0xff] %vm579, %v1409
    %v1411 = vsel %vm579, %v1387, -inf
    %v1412 = vrot.slane %v1411, 4
    %v1413 = vmax.f32 %v1411, %v1412
    %v1414 = vrot.slane %v1413, 2
    %v1415 = vmax.f32 %v1413, %v1414
    %v1416 = vrot.slane %v1415, 1
    %v1417 = vmax.f32 %v1415, %v1416
    %v1418 = vsub.f32 %v1387, %v1417
    %v1419 = vmul.f32 %v1418, 1.442695
    %v1420 = vpow.pop %v1419
    %v1421 = vsel %vm579, %v1420, 0.0
    %v1422 = vrot.slane %v1421, 4
    %v1423 = vadd.f32 %v1421, %v1422
    %v1424 = vrot.slane %v1423, 2
    %v1425 = vadd.f32 %v1423, %v1424
    %v1426 = vrot.slane %v1425, 1
    %v1427 = vadd.f32 %v1425, %v1426
    %v1428 = vlog2.pop %v1427
    %v1429 = vmul.f32 %v1428, 0.6931472
    %v1430 = vsub.f32 %v1418, %v1429
    %s1431 = scalar_lea.vmem [#allocation2], 8
    %1432 = vst.msk [vmem:[%s1431] sm:$0xff] %vm579, %v1430
    // Predicated region
    $region26: #{tpu_custom_call.1} parent=1 // pred_check
      _
    $region27: #{tpu_custom_call.1} parent=1 // pred_check_branch
      %1434 = sbr.rel (0) target = $region29
    $region28: #{tpu_custom_call.1} parent=1 // pred_region
      %s1436 = ssub.s32 256, 256
      %1437 = vsyncadd [#allocation3], %s1436
      %s1438 = sshll.u32 [#allocation2], 4
      %s1439 = int_to_ptr.vmem [resolvable:$true] %s1438
      %1444 = dma.vmem_to_hbm [thread:$0]  %s1439, 256, %s6, [#allocation3], 128, 128, 8
    $region29: #{tpu_custom_call.1} parent=1 // pred_fallthru
      _
    // Predicated region
    $region30: #{tpu_custom_call.1} parent=1 // pred_check
      _
    $region31: #{tpu_custom_call.1} parent=1 // pred_check_branch
      %1446 = sbr.rel (0) target = $region33
    $region32: #{tpu_custom_call.1} parent=1 // pred_region
      %1447 = dma.done [#allocation3], 256
    $region33: #{tpu_custom_call.1} parent=1 // pred_fallthru
      _
    %1448 = vsyncpa [#allocation3], 1

</llo_original>
